<compile_context>
chip_gen: v6e
topology: v6e:2x2x1
jax: 0.10.0
libtpu: 0.0.40
codegen_flags: <defaults>
</compile_context>

<pallas_src>
import functools

import jax
import jax.numpy as jnp
from jax import lax
from jax.experimental import pallas as pl
from jax.experimental.pallas import tpu as pltpu

LANE = 128


def _round_up(x, m):
    return (x + m - 1) // m * m


# --------------------------- Pallas kernels ---------------------------------

def _conv_bn_kernel(x_ref, w_ref, b_ref, o_ref, *, taps, ho, wo, relu):
    """Direct conv: per-tap bf16 matmuls accumulated in fp32, + bias [+ ReLU].

    x_ref : (n_phase, Hph, Wph, Cx)  bf16 phase-decomposed input slab (1 image)
    w_ref : (n_tap, Cx, TN)          bf16 per-tap weights (BN scale folded in)
    b_ref : (1, TN)                  f32 folded BN bias
    o_ref : (1, Ho*Wo, TN)
    taps  : static tuple of (phase_index, row_offset, col_offset) per tap
    """
    cx = x_ref.shape[-1]
    tn = o_ref.shape[-1]
    acc = jnp.zeros((ho * wo, tn), jnp.float32)
    for t, (ph, dh, dw) in enumerate(taps):
        xt = x_ref[ph, dh:dh + ho, dw:dw + wo, :].reshape(ho * wo, cx)
        acc = acc + jnp.dot(xt, w_ref[t], preferred_element_type=jnp.float32)
    y = acc + b_ref[...]
    if relu:
        y = jnp.maximum(y, 0.0)
    o_ref[...] = y.reshape(o_ref.shape).astype(o_ref.dtype)


def _conv_bn_add_relu_kernel(x_ref, w_ref, b_ref, r_ref, o_ref, *, taps, ho, wo):
    """Same as above, fused with residual add and the block's final ReLU."""
    cx = x_ref.shape[-1]
    tn = o_ref.shape[-1]
    acc = jnp.zeros((ho * wo, tn), jnp.float32)
    for t, (ph, dh, dw) in enumerate(taps):
        xt = x_ref[ph, dh:dh + ho, dw:dw + wo, :].reshape(ho * wo, cx)
        acc = acc + jnp.dot(xt, w_ref[t], preferred_element_type=jnp.float32)
    y = acc + b_ref[...] + r_ref[...].reshape(ho * wo, tn)
    o_ref[...] = jnp.maximum(y, 0.0).reshape(o_ref.shape).astype(o_ref.dtype)


# --------------------------- conv + folded BN wrapper -------------------------

def conv_bn(x_nhwc, w_oihw, scale, bias, *, stride, relu=False,
            residual=None, out_dtype=jnp.float32):
    """k x k conv (pad=(k-1)//2, given stride) with folded BatchNorm.

    x_nhwc may carry more channels than the weight's Cin (zero lane padding
    from a previous lane-padded conv output); extra weight rows are zero.
    Returns (N, Ho, Wo, Coutp) with Coutp = Cout rounded up to a multiple of
    128 (lane-dense); the caller slices [..., :Cout] at the end of the block.
    If `residual` (shape (N, Ho*Wo, Coutp), f32) is given, the kernel computes
    relu(conv*scale + bias + residual) — the block's final activation.
    """
    n, h, w, cx = x_nhwc.shape
    cout, cin, kh, kw = w_oihw.shape
    assert cx >= cin
    s = stride
    pad = (kh - 1) // 2
    ho = (h + 2 * pad - kh) // s + 1
    wo = (w + 2 * pad - kw) // s + 1
    hph = ho + (kh - 1) // s
    wph = wo + (kw - 1) // s

    # ---- space-to-depth phase decomposition (total bytes == padded input) ----
    xp = jnp.pad(x_nhwc, ((0, 0), (pad, pad), (pad, pad), (0, 0)))
    needed = sorted(set(((di % s), (dj % s)) for di in range(kh) for dj in range(kw)))
    phase_idx = {pq: i for i, pq in enumerate(needed)}
    phases = []
    for (p, q) in needed:
        phs = xp[:, p::s, q::s, :][:, :hph, :wph, :]
        dh, dw = hph - phs.shape[1], wph - phs.shape[2]
        if dh or dw:
            phs = jnp.pad(phs, ((0, 0), (0, dh), (0, dw), (0, 0)))
        phases.append(phs)
    n_phase = len(phases)
    # (N, n_phase, Hph, Wph, Cx) -> (N*n_phase, Hph, Wph, Cx); one grid block
    # along axis 0 per batch element covers exactly that image's phases.
    xph = jnp.stack(phases, axis=1).reshape(n * n_phase, hph, wph, cx)
    xph = xph.astype(jnp.bfloat16)

    # static per-tap (phase, row offset, col offset)
    taps = tuple((phase_idx[(di % s, dj % s)], di // s, dj // s)
                 for di in range(kh) for dj in range(kw))
    n_tap = len(taps)

    # ---- weights: fold BN scale, pad Cin->Cx and Cout->multiple of 128 -------
    coutp = _round_up(cout, LANE)
    wt = jnp.transpose(w_oihw, (2, 3, 1, 0)).astype(jnp.float32)  # (kh,kw,cin,cout)
    wt = wt * scale.astype(jnp.float32)                           # fold BN scale
    wt = wt.reshape(n_tap, cin, cout)
    wt = jnp.pad(wt, ((0, 0), (0, cx - cin), (0, coutp - cout)))
    wt = wt.astype(jnp.bfloat16)                                  # (n_tap, cx, coutp)
    b2 = jnp.pad(bias.astype(jnp.float32), (0, coutp - cout)).reshape(1, coutp)

    tn = LANE
    grid = (n, coutp // tn)

    x_spec = pl.BlockSpec((n_phase, hph, wph, cx), lambda i, j: (i, 0, 0, 0))
    w_spec = pl.BlockSpec((n_tap, cx, tn), lambda i, j: (0, 0, j))
    b_spec = pl.BlockSpec((1, tn), lambda i, j: (0, j))
    o_spec = pl.BlockSpec((1, ho * wo, tn), lambda i, j: (i, 0, j))
    out_shape = jax.ShapeDtypeStruct((n, ho * wo, coutp), out_dtype)

    # VMEM budget (double-buffered blocks + accumulator), capped for v7x (64MiB)
    est = (2 * n_phase * hph * wph * cx * 2          # input slab (bf16)
           + 2 * n_tap * cx * tn * 2                 # weights (bf16)
           + 2 * ho * wo * tn * jnp.dtype(out_dtype).itemsize
           + ho * wo * tn * 4 + 2 * tn * 4)
    if residual is not None:
        est += 2 * ho * wo * tn * 4
    vmem_limit = int(min(max(4 * est, 32 * 1024 * 1024), 48 * 1024 * 1024))
    cparams = pltpu.CompilerParams(
        dimension_semantics=("parallel", "parallel"),
        vmem_limit_bytes=vmem_limit)

    if residual is None:
        kern = functools.partial(_conv_bn_kernel, taps=taps, ho=ho, wo=wo, relu=relu)
        out = pl.pallas_call(
            kern, out_shape=out_shape, grid=grid,
            in_specs=[x_spec, w_spec, b_spec], out_specs=o_spec,
            compiler_params=cparams,
        )(xph, wt, b2)
    else:
        residual = residual.astype(jnp.float32)
        assert residual.shape == (n, ho * wo, coutp)
        r_spec = pl.BlockSpec((1, ho * wo, tn), lambda i, j: (i, 0, j))
        kern = functools.partial(_conv_bn_add_relu_kernel, taps=taps, ho=ho, wo=wo)
        out = pl.pallas_call(
            kern, out_shape=out_shape, grid=grid,
            in_specs=[x_spec, w_spec, b_spec, r_spec], out_specs=o_spec,
            compiler_params=cparams,
        )(xph, wt, b2, residual)
    return out.reshape(n, ho, wo, coutp)


# --------------------------- parameters --------------------------------------

def _bn_params(key, c):
    k1, k2, k3 = jax.random.split(key, 3)
    gamma = 1.0 + 0.1 * jax.random.normal(k1, (c,), jnp.float32)
    beta = 0.1 * jax.random.normal(k2, (c,), jnp.float32)
    running_mean = 0.1 * jax.random.normal(k3, (c,), jnp.float32)
    running_var = jnp.ones((c,), jnp.float32)
    return (gamma, beta, running_mean, running_var)


def _fold_bn(bn, eps=1e-5):
    gamma, beta, mean, var = bn
    scale = gamma / jnp.sqrt(var + eps)
    bias = beta - mean * scale
    return scale, bias


def init_basic_block_params(key, cin, cout, stride):
    ks = jax.random.split(key, 6)
    p = {
        "w1": 0.1 * jax.random.normal(ks[0], (cout, cin, 3, 3), jnp.float32),  # OIHW
        "bn1": _bn_params(ks[1], cout),
        "w2": 0.1 * jax.random.normal(ks[2], (cout, cout, 3, 3), jnp.float32),
        "bn2": _bn_params(ks[3], cout),
    }
    if stride != 1 or cin != cout:
        p["ws"] = 0.1 * jax.random.normal(ks[4], (cout, cin, 1, 1), jnp.float32)
        p["bns"] = _bn_params(ks[5], cout)
    return p


# --------------------------- BasicBlock forward -------------------------------

def basic_block_forward(x_nchw, params, stride):
    x = jnp.transpose(x_nchw, (0, 2, 3, 1))                       # NCHW -> NHWC
    n, h, w, cin = x.shape
    cout = params["w1"].shape[0]
    coutp = _round_up(cout, LANE)

    s1, b1 = _fold_bn(params["bn1"])
    # conv1 output stays lane-padded (coutp) and bf16: it only feeds conv2.
    y = conv_bn(x, params["w1"], s1, b1, stride=stride, relu=True,
                out_dtype=jnp.bfloat16)                           # (N,Ho,Wo,coutp)
    ho, wo = y.shape[1], y.shape[2]

    if "ws" in params:
        ss, bs = _fold_bn(params["bns"])
        shortcut = conv_bn(x, params["ws"], ss, bs, stride=stride, relu=False,
                           out_dtype=jnp.float32)
        res = shortcut.reshape(n, ho * wo, coutp)
    else:
        # identity shortcut: zero-pad channels to the lane-padded width
        res = jnp.pad(x.astype(jnp.float32).reshape(n, h * w, cin),
                      ((0, 0), (0, 0), (0, coutp - cin)))

    s2, b2 = _fold_bn(params["bn2"])
    out = conv_bn(y, params["w2"], s2, b2, stride=1, residual=res,
                  out_dtype=jnp.float32)                          # fused add+ReLU
    out = out[..., :cout]                                         # drop lane pad
    return jnp.transpose(out, (0, 3, 1, 2))                       # NHWC -> NCHW


# --------------------------- pure-JAX reference -------------------------------

def reference_forward(x_nchw, params, stride):
    dn = ("NCHW", "OIHW", "NCHW")

    def conv(x, w, s, pad):
        return lax.conv_general_dilated(
            x, w, (s, s), ((pad, pad), (pad, pad)), dimension_numbers=dn)

    def bn(x, bnp):
        sc, bi = _fold_bn(bnp)
        return x * sc[None, :, None, None] + bi[None, :, None, None]

    y = jax.nn.relu(bn(conv(x_nchw, params["w1"], stride, 1), params["bn1"]))
    y = bn(conv(y, params["w2"], 1, 1), params["bn2"])
    if "ws" in params:
        sc_path = bn(conv(x_nchw, params["ws"], stride, 0), params["bns"])
    else:
        sc_path = x_nchw
    return jax.nn.relu(y + sc_path)


# --------------------------- main ---------------------------------------------

if __name__ == "__main__":
    key = jax.random.PRNGKey(0)
    kx, kp1, kp2 = jax.random.split(key, 3)

    x = jax.random.normal(kx, (2, 4, 16, 16), jnp.float32)

    # Case 1: downsampling block with projection shortcut (stride=2, 4 -> 8 ch).
    params1 = init_basic_block_params(kp1, cin=4, cout=8, stride=2)
    out1 = jax.block_until_ready(basic_block_forward(x, params1, stride=2))
    ref1 = reference_forward(x, params1, stride=2)
    assert out1.shape == (2, 8, 8, 8)
    # bf16 MXU operands -> loosened tolerance (a real indexing/fusion bug
    # would produce O(1) errors, so this still catches correctness issues).
    assert jnp.allclose(out1, ref1, atol=5e-2, rtol=5e-2), \
        float(jnp.max(jnp.abs(out1 - ref1)))

    # Case 2: identity shortcut (stride=1, 4 -> 4 ch).
    params2 = init_basic_block_params(kp2, cin=4, cout=4, stride=1)
    out2 = jax.block_until_ready(basic_block_forward(x, params2, stride=1))
    ref2 = reference_forward(x, params2, stride=1)
    assert out2.shape == (2, 4, 16, 16)
    assert jnp.allclose(out2, ref2, atol=5e-2, rtol=5e-2), \
        float(jnp.max(jnp.abs(out2 - ref2)))

    print("KERNEL_OK")
</pallas_src>

<mosaic_0001>
module attributes {stable_mosaic.version = 11 : i64} {
  func.func @_conv_bn_kernel(%arg0: i32, %arg1: i32, %arg2: memref<4x9x9x4xbf16, #tpu.memory_space<vmem>>, %arg3: memref<9x4x128xbf16, #tpu.memory_space<vmem>>, %arg4: memref<1x128xf32, #tpu.memory_space<vmem>>, %arg5: memref<1x64x128xbf16, #tpu.memory_space<vmem>>) attributes {dimension_semantics = [#tpu.dimension_semantics<parallel>, #tpu.dimension_semantics<parallel>], iteration_bounds = array<i64: 2, 1>, scalar_prefetch = 0 : i64, scratch_operands = 0 : i64, tpu.core_type = #tpu.core_type<tc>, window_params = [{transform_indices = @transform_0, window_bounds = array<i64: 4, 9, 9, 4>}, {transform_indices = @transform_1, window_bounds = array<i64: 9, 4, 128>}, {transform_indices = @transform_2, window_bounds = array<i64: 1, 128>}, {transform_indices = @transform_3, window_bounds = array<i64: 1, 64, 128>}]} {
    %cst = arith.constant 0.000000e+00 : f32
    %0 = vector.broadcast %cst : f32 to vector<64x128xf32>
    %c0 = arith.constant 0 : index
    %c0_0 = arith.constant 0 : index
    %c0_1 = arith.constant 0 : index
    %c0_2 = arith.constant 0 : index
    %1 = vector.load %arg2[%c0, %c0_0, %c0_1, %c0_2] : memref<4x9x9x4xbf16, #tpu.memory_space<vmem>>, vector<1x8x8x4xbf16>
    %2 = vector.shape_cast %1 : vector<1x8x8x4xbf16> to vector<8x8x4xbf16>
    %3 = vector.shape_cast %2 : vector<8x8x4xbf16> to vector<64x4xbf16>
    %c0_3 = arith.constant 0 : index
    %c0_4 = arith.constant 0 : index
    %c0_5 = arith.constant 0 : index
    %4 = vector.load %arg3[%c0_3, %c0_4, %c0_5] : memref<9x4x128xbf16, #tpu.memory_space<vmem>>, vector<1x4x128xbf16>
    %5 = vector.shape_cast %4 : vector<1x4x128xbf16> to vector<4x128xbf16>
    %cst_6 = arith.constant dense<0.000000e+00> : vector<64x128xf32>
    %6 = tpu.matmul %3, %5, %cst_6 {dimension_numbers = #tpu.dot_dimension_numbers<[1], [0], [0], [1], [0, 0, 1, 1], [], []>} : vector<64x4xbf16>, vector<4x128xbf16>, vector<64x128xf32> -> vector<64x128xf32>
    %7 = arith.addf %0, %6 : vector<64x128xf32>
    %c1 = arith.constant 1 : index
    %c0_7 = arith.constant 0 : index
    %c0_8 = arith.constant 0 : index
    %c0_9 = arith.constant 0 : index
    %8 = vector.load %arg2[%c1, %c0_7, %c0_8, %c0_9] : memref<4x9x9x4xbf16, #tpu.memory_space<vmem>>, vector<1x8x8x4xbf16>
    %9 = vector.shape_cast %8 : vector<1x8x8x4xbf16> to vector<8x8x4xbf16>
    %10 = vector.shape_cast %9 : vector<8x8x4xbf16> to vector<64x4xbf16>
    %c1_10 = arith.constant 1 : index
    %c0_11 = arith.constant 0 : index
    %c0_12 = arith.constant 0 : index
    %11 = vector.load %arg3[%c1_10, %c0_11, %c0_12] : memref<9x4x128xbf16, #tpu.memory_space<vmem>>, vector<1x4x128xbf16>
    %12 = vector.shape_cast %11 : vector<1x4x128xbf16> to vector<4x128xbf16>
    %cst_13 = arith.constant dense<0.000000e+00> : vector<64x128xf32>
    %13 = tpu.matmul %10, %12, %cst_13 {dimension_numbers = #tpu.dot_dimension_numbers<[1], [0], [0], [1], [0, 0, 1, 1], [], []>} : vector<64x4xbf16>, vector<4x128xbf16>, vector<64x128xf32> -> vector<64x128xf32>
    %14 = arith.addf %7, %13 : vector<64x128xf32>
    %c0_14 = arith.constant 0 : index
    %c0_15 = arith.constant 0 : index
    %c1_16 = arith.constant 1 : index
    %c0_17 = arith.constant 0 : index
    %15 = vector.load %arg2[%c0_14, %c0_15, %c1_16, %c0_17] : memref<4x9x9x4xbf16, #tpu.memory_space<vmem>>, vector<1x8x8x4xbf16>
    %16 = vector.shape_cast %15 : vector<1x8x8x4xbf16> to vector<8x8x4xbf16>
    %17 = vector.shape_cast %16 : vector<8x8x4xbf16> to vector<64x4xbf16>
    %c2 = arith.constant 2 : index
    %c0_18 = arith.constant 0 : index
    %c0_19 = arith.constant 0 : index
    %18 = vector.load %arg3[%c2, %c0_18, %c0_19] : memref<9x4x128xbf16, #tpu.memory_space<vmem>>, vector<1x4x128xbf16>
    %19 = vector.shape_cast %18 : vector<1x4x128xbf16> to vector<4x128xbf16>
    %cst_20 = arith.constant dense<0.000000e+00> : vector<64x128xf32>
    %20 = tpu.matmul %17, %19, %cst_20 {dimension_numbers = #tpu.dot_dimension_numbers<[1], [0], [0], [1], [0, 0, 1, 1], [], []>} : vector<64x4xbf16>, vector<4x128xbf16>, vector<64x128xf32> -> vector<64x128xf32>
    %21 = arith.addf %14, %20 : vector<64x128xf32>
    %c2_21 = arith.constant 2 : index
    %c0_22 = arith.constant 0 : index
    %c0_23 = arith.constant 0 : index
    %c0_24 = arith.constant 0 : index
    %22 = vector.load %arg2[%c2_21, %c0_22, %c0_23, %c0_24] : memref<4x9x9x4xbf16, #tpu.memory_space<vmem>>, vector<1x8x8x4xbf16>
    %23 = vector.shape_cast %22 : vector<1x8x8x4xbf16> to vector<8x8x4xbf16>
    %24 = vector.shape_cast %23 : vector<8x8x4xbf16> to vector<64x4xbf16>
    %c3 = arith.constant 3 : index
    %c0_25 = arith.constant 0 : index
    %c0_26 = arith.constant 0 : index
    %25 = vector.load %arg3[%c3, %c0_25, %c0_26] : memref<9x4x128xbf16, #tpu.memory_space<vmem>>, vector<1x4x128xbf16>
    %26 = vector.shape_cast %25 : vector<1x4x128xbf16> to vector<4x128xbf16>
    %cst_27 = arith.constant dense<0.000000e+00> : vector<64x128xf32>
    %27 = tpu.matmul %24, %26, %cst_27 {dimension_numbers = #tpu.dot_dimension_numbers<[1], [0], [0], [1], [0, 0, 1, 1], [], []>} : vector<64x4xbf16>, vector<4x128xbf16>, vector<64x128xf32> -> vector<64x128xf32>
    %28 = arith.addf %21, %27 : vector<64x128xf32>
    %c3_28 = arith.constant 3 : index
    %c0_29 = arith.constant 0 : index
    %c0_30 = arith.constant 0 : index
    %c0_31 = arith.constant 0 : index
    %29 = vector.load %arg2[%c3_28, %c0_29, %c0_30, %c0_31] : memref<4x9x9x4xbf16, #tpu.memory_space<vmem>>, vector<1x8x8x4xbf16>
    %30 = vector.shape_cast %29 : vector<1x8x8x4xbf16> to vector<8x8x4xbf16>
    %31 = vector.shape_cast %30 : vector<8x8x4xbf16> to vector<64x4xbf16>
    %c4 = arith.constant 4 : index
    %c0_32 = arith.constant 0 : index
    %c0_33 = arith.constant 0 : index
    %32 = vector.load %arg3[%c4, %c0_32, %c0_33] : memref<9x4x128xbf16, #tpu.memory_space<vmem>>, vector<1x4x128xbf16>
    %33 = vector.shape_cast %32 : vector<1x4x128xbf16> to vector<4x128xbf16>
    %cst_34 = arith.constant dense<0.000000e+00> : vector<64x128xf32>
    %34 = tpu.matmul %31, %33, %cst_34 {dimension_numbers = #tpu.dot_dimension_numbers<[1], [0], [0], [1], [0, 0, 1, 1], [], []>} : vector<64x4xbf16>, vector<4x128xbf16>, vector<64x128xf32> -> vector<64x128xf32>
    %35 = arith.addf %28, %34 : vector<64x128xf32>
    %c2_35 = arith.constant 2 : index
    %c0_36 = arith.constant 0 : index
    %c1_37 = arith.constant 1 : index
    %c0_38 = arith.constant 0 : index
    %36 = vector.load %arg2[%c2_35, %c0_36, %c1_37, %c0_38] : memref<4x9x9x4xbf16, #tpu.memory_space<vmem>>, vector<1x8x8x4xbf16>
    %37 = vector.shape_cast %36 : vector<1x8x8x4xbf16> to vector<8x8x4xbf16>
    %38 = vector.shape_cast %37 : vector<8x8x4xbf16> to vector<64x4xbf16>
    %c5 = arith.constant 5 : index
    %c0_39 = arith.constant 0 : index
    %c0_40 = arith.constant 0 : index
    %39 = vector.load %arg3[%c5, %c0_39, %c0_40] : memref<9x4x128xbf16, #tpu.memory_space<vmem>>, vector<1x4x128xbf16>
    %40 = vector.shape_cast %39 : vector<1x4x128xbf16> to vector<4x128xbf16>
    %cst_41 = arith.constant dense<0.000000e+00> : vector<64x128xf32>
    %41 = tpu.matmul %38, %40, %cst_41 {dimension_numbers = #tpu.dot_dimension_numbers<[1], [0], [0], [1], [0, 0, 1, 1], [], []>} : vector<64x4xbf16>, vector<4x128xbf16>, vector<64x128xf32> -> vector<64x128xf32>
    %42 = arith.addf %35, %41 : vector<64x128xf32>
    %c0_42 = arith.constant 0 : index
    %c1_43 = arith.constant 1 : index
    %c0_44 = arith.constant 0 : index
    %c0_45 = arith.constant 0 : index
    %43 = vector.load %arg2[%c0_42, %c1_43, %c0_44, %c0_45] : memref<4x9x9x4xbf16, #tpu.memory_space<vmem>>, vector<1x8x8x4xbf16>
    %44 = vector.shape_cast %43 : vector<1x8x8x4xbf16> to vector<8x8x4xbf16>
    %45 = vector.shape_cast %44 : vector<8x8x4xbf16> to vector<64x4xbf16>
    %c6 = arith.constant 6 : index
    %c0_46 = arith.constant 0 : index
    %c0_47 = arith.constant 0 : index
    %46 = vector.load %arg3[%c6, %c0_46, %c0_47] : memref<9x4x128xbf16, #tpu.memory_space<vmem>>, vector<1x4x128xbf16>
    %47 = vector.shape_cast %46 : vector<1x4x128xbf16> to vector<4x128xbf16>
    %cst_48 = arith.constant dense<0.000000e+00> : vector<64x128xf32>
    %48 = tpu.matmul %45, %47, %cst_48 {dimension_numbers = #tpu.dot_dimension_numbers<[1], [0], [0], [1], [0, 0, 1, 1], [], []>} : vector<64x4xbf16>, vector<4x128xbf16>, vector<64x128xf32> -> vector<64x128xf32>
    %49 = arith.addf %42, %48 : vector<64x128xf32>
    %c1_49 = arith.constant 1 : index
    %c1_50 = arith.constant 1 : index
    %c0_51 = arith.constant 0 : index
    %c0_52 = arith.constant 0 : index
    %50 = vector.load %arg2[%c1_49, %c1_50, %c0_51, %c0_52] : memref<4x9x9x4xbf16, #tpu.memory_space<vmem>>, vector<1x8x8x4xbf16>
    %51 = vector.shape_cast %50 : vector<1x8x8x4xbf16> to vector<8x8x4xbf16>
    %52 = vector.shape_cast %51 : vector<8x8x4xbf16> to vector<64x4xbf16>
    %c7 = arith.constant 7 : index
    %c0_53 = arith.constant 0 : index
    %c0_54 = arith.constant 0 : index
    %53 = vector.load %arg3[%c7, %c0_53, %c0_54] : memref<9x4x128xbf16, #tpu.memory_space<vmem>>, vector<1x4x128xbf16>
    %54 = vector.shape_cast %53 : vector<1x4x128xbf16> to vector<4x128xbf16>
    %cst_55 = arith.constant dense<0.000000e+00> : vector<64x128xf32>
    %55 = tpu.matmul %52, %54, %cst_55 {dimension_numbers = #tpu.dot_dimension_numbers<[1], [0], [0], [1], [0, 0, 1, 1], [], []>} : vector<64x4xbf16>, vector<4x128xbf16>, vector<64x128xf32> -> vector<64x128xf32>
    %56 = arith.addf %49, %55 : vector<64x128xf32>
    %c0_56 = arith.constant 0 : index
    %c1_57 = arith.constant 1 : index
    %c1_58 = arith.constant 1 : index
    %c0_59 = arith.constant 0 : index
    %57 = vector.load %arg2[%c0_56, %c1_57, %c1_58, %c0_59] : memref<4x9x9x4xbf16, #tpu.memory_space<vmem>>, vector<1x8x8x4xbf16>
    %58 = vector.shape_cast %57 : vector<1x8x8x4xbf16> to vector<8x8x4xbf16>
    %59 = vector.shape_cast %58 : vector<8x8x4xbf16> to vector<64x4xbf16>
    %c8 = arith.constant 8 : index
    %c0_60 = arith.constant 0 : index
    %c0_61 = arith.constant 0 : index
    %60 = vector.load %arg3[%c8, %c0_60, %c0_61] : memref<9x4x128xbf16, #tpu.memory_space<vmem>>, vector<1x4x128xbf16>
    %61 = vector.shape_cast %60 : vector<1x4x128xbf16> to vector<4x128xbf16>
    %cst_62 = arith.constant dense<0.000000e+00> : vector<64x128xf32>
    %62 = tpu.matmul %59, %61, %cst_62 {dimension_numbers = #tpu.dot_dimension_numbers<[1], [0], [0], [1], [0, 0, 1, 1], [], []>} : vector<64x4xbf16>, vector<4x128xbf16>, vector<64x128xf32> -> vector<64x128xf32>
    %63 = arith.addf %56, %62 : vector<64x128xf32>
    %c0_63 = arith.constant 0 : index
    %c0_64 = arith.constant 0 : index
    %64 = vector.load %arg4[%c0_63, %c0_64] : memref<1x128xf32, #tpu.memory_space<vmem>>, vector<1x128xf32>
    %65 = vector.broadcast %64 : vector<1x128xf32> to vector<64x128xf32>
    %66 = arith.addf %63, %65 : vector<64x128xf32>
    %cst_65 = arith.constant 0.000000e+00 : f32
    %67 = vector.broadcast %cst_65 : f32 to vector<64x128xf32>
    %68 = arith.maximumf %66, %67 : vector<64x128xf32>
    %69 = vector.shape_cast %68 : vector<64x128xf32> to vector<1x64x128xf32>
    %70 = arith.truncf %69 : vector<1x64x128xf32> to vector<1x64x128xbf16>
    %c0_66 = arith.constant 0 : index
    %c0_67 = arith.constant 0 : index
    %c0_68 = arith.constant 0 : index
    %71 = vector.load %arg5[%c0_66, %c0_67, %c0_68] : memref<1x64x128xbf16, #tpu.memory_space<vmem>>, vector<1x64x128xbf16>
    tpu.vector_store %arg5[%c0_66, %c0_67, %c0_68], %70 {strides = array<i32>} : memref<1x64x128xbf16, #tpu.memory_space<vmem>>, vector<1x64x128xbf16>,
    return
  }
  func.func @transform_0(%arg0: i32, %arg1: i32) -> (i32, i32, i32, i32) {
    %c0_i32 = arith.constant 0 : i32
    %c0_i32_0 = arith.constant 0 : i32
    %c0_i32_1 = arith.constant 0 : i32
    %c0_i32_2 = arith.constant 0 : i32
    return %arg0, %c0_i32, %c0_i32_0, %c0_i32_1 : i32, i32, i32, i32
  }
  func.func @transform_1(%arg0: i32, %arg1: i32) -> (i32, i32, i32) {
    %c0_i32 = arith.constant 0 : i32
    %c0_i32_0 = arith.constant 0 : i32
    %c0_i32_1 = arith.constant 0 : i32
    return %c0_i32, %c0_i32_0, %arg1 : i32, i32, i32
  }
  func.func @transform_2(%arg0: i32, %arg1: i32) -> (i32, i32) {
    %c0_i32 = arith.constant 0 : i32
    %c0_i32_0 = arith.constant 0 : i32
    return %c0_i32, %arg1 : i32, i32
  }
  func.func @transform_3(%arg0: i32, %arg1: i32) -> (i32, i32, i32) {
    %c0_i32 = arith.constant 0 : i32
    %c0_i32_0 = arith.constant 0 : i32
    return %arg0, %c0_i32, %arg1 : i32, i32, i32
  }
}

</mosaic_0001>

<llo_original>
// kernel: tpu_custom_call.1
$region0: #{tpu_custom_call.1}
  #allocation0 [shape = 'u32[]', space=smem, size = 0x4, offset = 0x4, fixed_abs, tag = 'smem constant byte address 0x4 - core index']
  #allocation1 [shape = 'u32[144,128]{1,0:T(1,128)}', space=vmem, size = 0x12000, scoped, tag = 'internal scratch']
  %s0 = inlined_call_operand.vmem [shape: bf16[8,9,9,4], index: 0, kind: input, shape index: {}]
  %s1 = inlined_call_operand.vmem [shape: bf16[9,4,128], index: 1, kind: input, shape index: {}]
  %s2 = inlined_call_operand.vmem [shape: f32[1,128], index: 2, kind: input, shape index: {}]
  %s3 = inlined_call_operand.hbm [shape: bf16[2,64,128], index: 3, kind: output, shape index: {}]
  %s4 = sld [smem:[#allocation0]]
  $region45: #{tpu_custom_call.1} parent=0
    _
  %s6 = ssub.s32 1, %s4
  %s7 = scalar_select 0, %s6, %s4
  $region1: #{tpu_custom_call.1} parent=0
    #allocation2 [shape = 'u8[32768]{0}', space=vmem, size = 0x8000, scoped, tag = 'output window, operand 0']
    #allocation3 [shape = 's32[2]{0}', space=sflag, size = 0x8, scoped, tag = 'scoped memory for tpu_custom_call.1']
    %8 = vsyncpa [#allocation3], 0
    %s9 = scalar_lea.sflag [#allocation3], 1
    %10 = vsyncpa %s9, 0
    loop: start=0, step=1, limit=4
    $region2: #{tpu_custom_call.1} parent=1 // loop_pre_header
      _
    $region3: #{tpu_custom_call.1} parent=1 // loop_header
      %s12 = sphi 0, %s16
      %p13 = scmp.ge.s32.totalorder %s12, 4
      %s19 = sphi 0, %s31
      %s20 = sphi 0, %s27
      %s21 = sphi 0, %s19
      %s22 = sphi 0, %s20
      %s23 = sphi 0, %s21
      %s24 = sphi 0, %s22
      %s34 = sphi 0, %s36
      %s37 = sphi 0, %s34
      %s38 = sphi 0, %s37
      %s54 = sphi 0, %s38
      %s60 = sphi 0, %s62
      %s63 = sphi 0, %s60
      %s64 = sphi 0, %s63
      %s80 = sphi 0, %s64
      %s86 = sphi 0, %s88
      %s89 = sphi 0, %s86
      %s90 = sphi 0, %s89
      %s106 = sphi 0, %s90
      %s114 = sphi 0, %s116
      %s117 = sphi 0, %s114
      %s118 = sphi 0, %s117
      %s134 = sphi 0, %s118
    $region4: #{tpu_custom_call.1} parent=1 // loop_header_branch
      %15 = sbr.rel (%p13) target = $region8
    $region5: #{tpu_custom_call.1} parent=1 // loop_body
      %s17 = ssub.s32 %s12, 1
      %s18 = ssub.s32 %s12, 2
      %s25 = sadd.s32 1, %s20
      %p26 = scmp.ge.s32.totalorder %s25, 1
      %s27 = scalar_select %p26, 0, %s25
      %s28 = sadd.s32 1, %s19
      %s29 = scalar_select %p26, %s28, %s19
      %p30 = scmp.ge.s32.totalorder %s29, 2
      %s31 = scalar_select %p30, 0, %s29
      %s32 = ssub.s32 %s19, %s31
      %p33 = scmp.eq.s32.totalorder %s32, 0
      %s35 = sadd.s32 %s34, 1
      %s36 = scalar_select %p33, %s34, %s35
      %p39 = pneg %p33
      %p40 = scmp.eq.s32.totalorder %s12, 1
      %p41 = por %p39, %p40
      %p42 = scmp.ne.s32.totalorder %s34, %s37
      %p43 = scmp.eq.s32.totalorder %s12, 0
      %p44 = por %p42, %p43
      %p45 = scmp.ne.s32.totalorder %s34, %s37
      %p46 = scmp.eq.s32.totalorder %s17, 1
      %p47 = por %p45, %p46
      %p48 = scmp.ne.s32.totalorder %s37, %s38
      %p49 = scmp.eq.s32.totalorder %s17, 0
      %p50 = por %p48, %p49
      %p51 = scmp.ne.s32.totalorder %s37, %s38
      %p52 = scmp.eq.s32.totalorder %s18, 1
      %p53 = por %p51, %p52
      %p55 = scmp.ne.s32.totalorder %s38, %s54
      %p56 = scmp.eq.s32.totalorder %s18, 0
      %p57 = por %p55, %p56
      %s58 = ssub.s32 %s20, %s27
      %p59 = scmp.eq.s32.totalorder %s58, 0
      %s61 = sadd.s32 %s60, 1
      %s62 = scalar_select %p59, %s60, %s61
      %p65 = pneg %p59
      %p66 = scmp.eq.s32.totalorder %s12, 1
      %p67 = por %p65, %p66
      %p68 = scmp.ne.s32.totalorder %s60, %s63
      %p69 = scmp.eq.s32.totalorder %s12, 0
      %p70 = por %p68, %p69
      %p71 = scmp.ne.s32.totalorder %s60, %s63
      %p72 = scmp.eq.s32.totalorder %s17, 1
      %p73 = por %p71, %p72
      %p74 = scmp.ne.s32.totalorder %s63, %s64
      %p75 = scmp.eq.s32.totalorder %s17, 0
      %p76 = por %p74, %p75
      %p77 = scmp.ne.s32.totalorder %s63, %s64
      %p78 = scmp.eq.s32.totalorder %s18, 1
      %p79 = por %p77, %p78
      %p81 = scmp.ne.s32.totalorder %s64, %s80
      %p82 = scmp.eq.s32.totalorder %s18, 0
      %p83 = por %p81, %p82
      %s84 = ssub.s32 %s20, %s27
      %p85 = scmp.eq.s32.totalorder %s84, 0
      %s87 = sadd.s32 %s86, 1
      %s88 = scalar_select %p85, %s86, %s87
      %p91 = pneg %p85
      %p92 = scmp.eq.s32.totalorder %s12, 1
      %p93 = por %p91, %p92
      %p94 = scmp.ne.s32.totalorder %s86, %s89
      %p95 = scmp.eq.s32.totalorder %s12, 0
      %p96 = por %p94, %p95
      %p97 = scmp.ne.s32.totalorder %s86, %s89
      %p98 = scmp.eq.s32.totalorder %s17, 1
      %p99 = por %p97, %p98
      %p100 = scmp.ne.s32.totalorder %s89, %s90
      %p101 = scmp.eq.s32.totalorder %s17, 0
      %p102 = por %p100, %p101
      %p103 = scmp.ne.s32.totalorder %s89, %s90
      %p104 = scmp.eq.s32.totalorder %s18, 1
      %p105 = por %p103, %p104
      %p107 = scmp.ne.s32.totalorder %s90, %s106
      %p108 = scmp.eq.s32.totalorder %s18, 0
      %p109 = por %p107, %p108
      %s110 = ssub.s32 %s19, %s31
      %s111 = ssub.s32 %s20, %s27
      %s112 = sor.u32 %s110, %s111
      %p113 = scmp.eq.s32.totalorder %s112, 0
      %s115 = sadd.s32 %s114, 1
      %s116 = scalar_select %p113, %s114, %s115
      %p119 = pneg %p113
      %p120 = scmp.eq.s32.totalorder %s12, 1
      %p121 = por %p119, %p120
      %p122 = scmp.ne.s32.totalorder %s114, %s117
      %p123 = scmp.eq.s32.totalorder %s12, 0
      %p124 = por %p122, %p123
      %p125 = scmp.ne.s32.totalorder %s114, %s117
      %p126 = scmp.eq.s32.totalorder %s17, 1
      %p127 = por %p125, %p126
      %p128 = scmp.ne.s32.totalorder %s117, %s118
      %p129 = scmp.eq.s32.totalorder %s17, 0
      %p130 = por %p128, %p129
      %p131 = scmp.ne.s32.totalorder %s117, %s118
      %p132 = scmp.eq.s32.totalorder %s18, 1
      %p133 = por %p131, %p132
      %p135 = scmp.ne.s32.totalorder %s118, %s134
      %p136 = scmp.eq.s32.totalorder %s18, 0
      %p137 = por %p135, %p136
      %p138 = scmp.le.s32.totalorder 1, %s12
      %p139 = scmp.lt.s32.totalorder %s12, 3
      %p140 = pnand %p138, %p139
      %p141 = pneg %p140
      // Predicated region
      $region9: #{tpu_custom_call.1} parent=5 // pred_check
        _
      $region10: #{tpu_custom_call.1} parent=5 // pred_check_branch
        %143 = sbr.rel (%p140) target = $region12
      $region11: #{tpu_custom_call.1} parent=5 // pred_region
        %s144 = ssub.s32 %s12, 1
        // Predicated region
        $region13: #{tpu_custom_call.1} parent=11 // pred_check
          %p145 = pneg %p76
        $region14: #{tpu_custom_call.1} parent=11 // pred_check_branch
          %147 = sbr.rel (%p145) target = $region16
        $region15: #{tpu_custom_call.1} parent=11 // pred_region
          %p148 = scmp.lt.s32.totalorder %s22, 0
          %s149 = scalar_select %p148, %s22, 0
          %s150 = smul.addr %s149, 2
          %s151 = scalar_lea.vmem %s1, %s150
        $region16: #{tpu_custom_call.1} parent=11 // pred_fallthru
          _
        // Predicated region
        $region17: #{tpu_custom_call.1} parent=11 // pred_check
          %p152 = pneg %p102
        $region18: #{tpu_custom_call.1} parent=11 // pred_check_branch
          %154 = sbr.rel (%p152) target = $region20
        $region19: #{tpu_custom_call.1} parent=11 // pred_region
          %p155 = scmp.lt.s32.totalorder %s22, 0
          %s156 = scalar_select %p155, %s22, 0
          %s157 = scalar_lea.vmem %s2, %s156
        $region20: #{tpu_custom_call.1} parent=11 // pred_fallthru
          _
      $region12: #{tpu_custom_call.1} parent=5 // pred_fallthru
        _
      %p158 = scmp.lt.s32.totalorder %s12, 2
      // Predicated region
      $region21: #{tpu_custom_call.1} parent=5 // pred_check
        %p159 = pneg %p158
      $region22: #{tpu_custom_call.1} parent=5 // pred_check_branch
        %161 = sbr.rel (%p159) target = $region24
      $region23: #{tpu_custom_call.1} parent=5 // pred_region
        // Predicated region
        $region25: #{tpu_custom_call.1} parent=23 // pred_check
          %p162 = pneg %p44
        $region26: #{tpu_custom_call.1} parent=23 // pred_check_branch
          %164 = sbr.rel (%p162) target = $region28
        $region27: #{tpu_custom_call.1} parent=23 // pred_region
          %s165 = smul.u32 4, %s19
          %p166 = scmp.lt.s32.totalorder %s165, 7
          %s167 = scalar_select %p166, %s165, 7
          %s168 = smul.addr %s167, 18
          %s169 = smul.addr %s168, 4
          %s170 = scalar_lea.vmem %s0, %s169
          %s171 = smul.u32 4, %s19
        $region28: #{tpu_custom_call.1} parent=23 // pred_fallthru
          _
      $region24: #{tpu_custom_call.1} parent=5 // pred_fallthru
        _
      %p172 = scmp.le.s32.totalorder 1, %s12
      %p173 = scmp.lt.s32.totalorder %s12, 3
      %p174 = pnand %p172, %p173
      %p175 = pneg %p174
      // Predicated region
      $region29: #{tpu_custom_call.1} parent=5 // pred_check
        _
      $region30: #{tpu_custom_call.1} parent=5 // pred_check_branch
        %177 = sbr.rel (%p174) target = $region32
      $region31: #{tpu_custom_call.1} parent=5 // pred_region
        %s178 = ssub.s32 %s12, 1
        %s179 = smul.u32 4, %s21
        %p180 = scmp.lt.s32.totalorder %s179, 7
        %s181 = scalar_select %p180, %s179, 7
        %s182 = smul.addr %s181, 18
        %s183 = smul.addr %s182, 4
        %s184 = scalar_lea.vmem %s0, %s183
        %p185 = pneg %p50
        %p186 = pneg %p47
        %p187 = scmp.lt.s32.totalorder %s22, 0
        %s188 = scalar_select %p187, %s22, 0
        %s189 = smul.addr %s188, 2
        %s190 = scalar_lea.vmem %s1, %s189
        %p191 = pneg %p76
        %p192 = pneg %p73
        %p193 = scmp.lt.s32.totalorder %s22, 0
        %s194 = scalar_select %p193, %s22, 0
        %s195 = scalar_lea.vmem %s2, %s194
        %p196 = pneg %p102
        %p197 = pneg %p99
        %p198 = pneg %p130
        %p199 = pneg %p127
        %s200 = sand.u32 %s117, 1
        %s201 = scalar_lea.sflag [#allocation3], %s200
        %s202 = sand.u32 %s117, 1
        %s203 = smul.addr %s202, 32
        %s204 = scalar_lea.vmem [#allocation2], %s203
        %s205 = smul.u32 4, %s21
        %p206 = scmp.lt.s32.totalorder %s205, 7
        %s207 = scalar_select %p206, %s205, 7
        %s208 = smul.addr %s207, 18
        %s209 = smul.addr %s208, 4
        %s210 = scalar_lea.vmem %s0, %s209
        %s211 = smul.u32 4, %s21
        %p212 = scmp.lt.s32.totalorder %s22, 0
        %s213 = scalar_select %p212, %s22, 0
        %s214 = smul.addr %s213, 2
        %s215 = scalar_lea.vmem %s1, %s214
        %p216 = scmp.lt.s32.totalorder %s22, 0
        %s217 = scalar_select %p216, %s22, 0
        %s218 = scalar_lea.vmem %s2, %s217
        %v220 = vld [vmem:[%s210] sm:$0xf]
        %v221 = vld [vmem:[%s210 + $0x8] sm:$0xf]
        %v222 = vld [vmem:[%s210 + $0x10] sm:$0xf]
        %v223 = vld [vmem:[%s210 + $0x18] sm:$0xf]
        %v224 = vld [vmem:[%s210 + $0x20] sm:$0xf]
        %v225 = vld [vmem:[%s210 + $0x28] sm:$0xf]
        %v226 = vld [vmem:[%s210 + $0x30] sm:$0xf]
        %v227 = vld [vmem:[%s210 + $0x38] sm:$0xf]
        %v228 = vld [vmem:[%s215] sm:$0x3]
        %s229 = scalar_lea.vmem %s210, 72
        %v230 = vld [vmem:[%s229] sm:$0xf]
        %v231 = vld [vmem:[%s229 + $0x8] sm:$0xf]
        %v232 = vld [vmem:[%s229 + $0x10] sm:$0xf]
        %v233 = vld [vmem:[%s229 + $0x18] sm:$0xf]
        %v234 = vld [vmem:[%s229 + $0x20] sm:$0xf]
        %v235 = vld [vmem:[%s229 + $0x28] sm:$0xf]
        %v236 = vld [vmem:[%s229 + $0x30] sm:$0xf]
        %v237 = vld [vmem:[%s229 + $0x38] sm:$0xf]
        %s238 = scalar_lea.vmem %s215, 2
        %v239 = vld [vmem:[%s238] sm:$0x3]
        %v248 = vunpack.c.l.b16 %v230
        %v249 = vunpack.c.l.b16 %v231
        %v250 = vunpack.c.l.b16 %v232
        %v251 = vunpack.c.l.b16 %v233
        %v252 = vunpack.c.l.b16 %v234
        %v253 = vunpack.c.l.b16 %v235
        %v254 = vunpack.c.l.b16 %v236
        %v255 = vunpack.c.l.b16 %v237
        %v256 = vpack.c.b16 %v249, %v248
        %v257 = vpack.c.b16 %v251, %v250
        %v258 = vpack.c.b16 %v253, %v252
        %v259 = vpack.c.b16 %v255, %v254
        %vm260 = vcmask 31744
        %v262 = vsel %vm260, %v256, 0
        %v265 = vsel %vm260, %v257, 0
        %v268 = vsel %vm260, %v258, 0
        %v271 = vsel %vm260, %v259, 0
        %vm273 = vcmask 1041408
        %v275 = vsel %vm273, %v239, 0
        %277 = vmatprep.subr.bf16.mxu0 0
        %278 = vmatpush1.bf16.msra.mxu0 0
        %279 = vmatprep.subr.bf16.mxu0 0
        %280 = vmatpush1.bf16.msra.mxu0 0
        %281 = vmatprep.subr.bf16.mxu0 0
        %282 = vmatpush1.bf16.msra.mxu0 0
        %283 = vmatprep.subr.bf16.mxu0 0
        %284 = vmatpush1.bf16.msra.mxu0 0
        %285 = vmatprep.subr.bf16.mxu0 0
        %286 = vmatpush1.bf16.msra.mxu0 0
        %287 = vmatprep.subr.bf16.mxu0 0
        %288 = vmatpush1.bf16.msra.mxu0 0
        %289 = vmatprep.subr.bf16.mxu0 0
        %290 = vmatpush1.bf16.msra.mxu0 0
        %291 = vmatprep.subr.bf16.mxu0 0
        %292 = vmatpush1.bf16.msra.mxu0 %v275
        %293 = vmatprep.subr.bf16.mxu0 0
        %294 = vmatpush2.bf16.msra.mxu0 0
        %295 = vmatprep.subr.bf16.mxu0 0
        %296 = vmatpush2.bf16.msra.mxu0 0
        %297 = vmatprep.subr.bf16.mxu0 0
        %298 = vmatpush2.bf16.msra.mxu0 0
        %299 = vmatprep.subr.bf16.mxu0 0
        %300 = vmatpush2.bf16.msra.mxu0 0
        %301 = vmatprep.subr.bf16.mxu0 0
        %302 = vmatpush2.bf16.msra.mxu0 0
        %303 = vmatprep.subr.bf16.mxu0 0
        %304 = vmatpush2.bf16.msra.mxu0 0
        %305 = vmatprep.subr.bf16.mxu0 0
        %306 = vmatpush2.bf16.msra.mxu0 0
        %307 = vmatprep.subr.bf16.mxu0 0
        %308 = vmatpush2.bf16.msra.mxu0 0
        %309 = vmatprep.mubr.bf16.mxu0 0
        %310 = vmatmul.mubr.bf16.gmra.mxu0 %v262
        %v311 = vpop.f32.mrf.mxu0
        %v312 = vadd.f32 0.0, %v311
        %v313 = vpop.f32.mrf.mxu0
        %v314 = vpop.f32.mrf.mxu0
        %v315 = vadd.f32 0.0, %v314
        %v316 = vpop.f32.mrf.mxu0
        %317 = vmatprep.mubr.bf16.mxu0 0
        %318 = vmatmul.mubr.bf16.gmra.mxu0 %v265
        %v319 = vpop.f32.mrf.mxu0
        %v320 = vadd.f32 0.0, %v319
        %v321 = vpop.f32.mrf.mxu0
        %v322 = vpop.f32.mrf.mxu0
        %v323 = vadd.f32 0.0, %v322
        %v324 = vpop.f32.mrf.mxu0
        %325 = vmatprep.mubr.bf16.mxu0 0
        %326 = vmatmul.mubr.bf16.gmra.mxu0 %v268
        %v327 = vpop.f32.mrf.mxu0
        %v328 = vadd.f32 0.0, %v327
        %v329 = vpop.f32.mrf.mxu0
        %v330 = vpop.f32.mrf.mxu0
        %v331 = vadd.f32 0.0, %v330
        %v332 = vpop.f32.mrf.mxu0
        %333 = vmatprep.mubr.bf16.mxu0 0
        %334 = vmatmul.mubr.bf16.gmra.mxu0 %v271
        %v335 = vpop.f32.mrf.mxu0
        %v336 = vadd.f32 0.0, %v335
        %v337 = vpop.f32.mrf.mxu0
        %v338 = vpop.f32.mrf.mxu0
        %v339 = vadd.f32 0.0, %v338
        %v340 = vpop.f32.mrf.mxu0
        %341 = vdwg.mxu0
        %v350 = vunpack.c.l.b16 %v220
        %v351 = vunpack.c.l.b16 %v221
        %v352 = vunpack.c.l.b16 %v222
        %v353 = vunpack.c.l.b16 %v223
        %v354 = vunpack.c.l.b16 %v224
        %v355 = vunpack.c.l.b16 %v225
        %v356 = vunpack.c.l.b16 %v226
        %v357 = vunpack.c.l.b16 %v227
        %v358 = vpack.c.b16 %v351, %v350
        %v359 = vpack.c.b16 %v353, %v352
        %v360 = vpack.c.b16 %v355, %v354
        %v361 = vpack.c.b16 %v357, %v356
        %v363 = vsel %vm260, %v358, 0
        %v366 = vsel %vm260, %v359, 0
        %v369 = vsel %vm260, %v360, 0
        %v372 = vsel %vm260, %v361, 0
        %v375 = vsel %vm273, %v228, 0
        %377 = vmatprep.subr.bf16.mxu0 0
        %378 = vmatpush1.bf16.msra.mxu0 0
        %379 = vmatprep.subr.bf16.mxu0 0
        %380 = vmatpush1.bf16.msra.mxu0 0
        %381 = vmatprep.subr.bf16.mxu0 0
        %382 = vmatpush1.bf16.msra.mxu0 0
        %383 = vmatprep.subr.bf16.mxu0 0
        %384 = vmatpush1.bf16.msra.mxu0 0
        %385 = vmatprep.subr.bf16.mxu0 0
        %386 = vmatpush1.bf16.msra.mxu0 0
        %387 = vmatprep.subr.bf16.mxu0 0
        %388 = vmatpush1.bf16.msra.mxu0 0
        %389 = vmatprep.subr.bf16.mxu0 0
        %390 = vmatpush1.bf16.msra.mxu0 0
        %391 = vmatprep.subr.bf16.mxu0 0
        %392 = vmatpush1.bf16.msra.mxu0 %v375
        %393 = vmatprep.subr.bf16.mxu0 0
        %394 = vmatpush2.bf16.msra.mxu0 0
        %395 = vmatprep.subr.bf16.mxu0 0
        %396 = vmatpush2.bf16.msra.mxu0 0
        %397 = vmatprep.subr.bf16.mxu0 0
        %398 = vmatpush2.bf16.msra.mxu0 0
        %399 = vmatprep.subr.bf16.mxu0 0
        %400 = vmatpush2.bf16.msra.mxu0 0
        %401 = vmatprep.subr.bf16.mxu0 0
        %402 = vmatpush2.bf16.msra.mxu0 0
        %403 = vmatprep.subr.bf16.mxu0 0
        %404 = vmatpush2.bf16.msra.mxu0 0
        %405 = vmatprep.subr.bf16.mxu0 0
        %406 = vmatpush2.bf16.msra.mxu0 0
        %407 = vmatprep.subr.bf16.mxu0 0
        %408 = vmatpush2.bf16.msra.mxu0 0
        %409 = vmatprep.mubr.bf16.mxu0 0
        %410 = vmatmul.mubr.bf16.gmra.mxu0 %v363
        %v411 = vpop.f32.mrf.mxu0
        %v412 = vadd.f32 %v312, %v411
        %v413 = vpop.f32.mrf.mxu0
        %v414 = vpop.f32.mrf.mxu0
        %v415 = vadd.f32 %v315, %v414
        %v416 = vpop.f32.mrf.mxu0
        %417 = vmatprep.mubr.bf16.mxu0 0
        %418 = vmatmul.mubr.bf16.gmra.mxu0 %v366
        %v419 = vpop.f32.mrf.mxu0
        %v420 = vadd.f32 %v320, %v419
        %v421 = vpop.f32.mrf.mxu0
        %v422 = vpop.f32.mrf.mxu0
        %v423 = vadd.f32 %v323, %v422
        %v424 = vpop.f32.mrf.mxu0
        %425 = vmatprep.mubr.bf16.mxu0 0
        %426 = vmatmul.mubr.bf16.gmra.mxu0 %v369
        %v427 = vpop.f32.mrf.mxu0
        %v428 = vadd.f32 %v328, %v427
        %v429 = vpop.f32.mrf.mxu0
        %v430 = vpop.f32.mrf.mxu0
        %v431 = vadd.f32 %v331, %v430
        %v432 = vpop.f32.mrf.mxu0
        %433 = vmatprep.mubr.bf16.mxu0 0
        %434 = vmatmul.mubr.bf16.gmra.mxu0 %v372
        %v435 = vpop.f32.mrf.mxu0
        %v436 = vadd.f32 %v336, %v435
        %v437 = vpop.f32.mrf.mxu0
        %v438 = vpop.f32.mrf.mxu0
        %v439 = vadd.f32 %v339, %v438
        %v440 = vpop.f32.mrf.mxu0
        %441 = vdwg.mxu0
        %v442 = vld [vmem:[%s210] sm:$0xf]
        %v443 = vld [vmem:[%s210 + $0x4] sm:$0x1]
        %v444 = vld [vmem:[%s210 + $0x8] sm:$0xf]
        %v445 = vld [vmem:[%s210 + $0xc] sm:$0x1]
        %v446 = vld [vmem:[%s210 + $0x10] sm:$0xf]
        %v447 = vld [vmem:[%s210 + $0x14] sm:$0x1]
        %v448 = vld [vmem:[%s210 + $0x18] sm:$0xf]
        %v449 = vld [vmem:[%s210 + $0x1c] sm:$0x1]
        %v450 = vld [vmem:[%s210 + $0x20] sm:$0xf]
        %v451 = vld [vmem:[%s210 + $0x24] sm:$0x1]
        %v452 = vld [vmem:[%s210 + $0x28] sm:$0xf]
        %v453 = vld [vmem:[%s210 + $0x2c] sm:$0x1]
        %v454 = vld [vmem:[%s210 + $0x30] sm:$0xf]
        %v455 = vld [vmem:[%s210 + $0x34] sm:$0x1]
        %v456 = vld [vmem:[%s210 + $0x38] sm:$0xf]
        %v457 = vld [vmem:[%s210 + $0x3c] sm:$0x1]
        %vm458 = vsmask.f32 3328
        %vm459 = vsmask.f32 7440
        %vm460 = vmor %vm458, %vm459
        %v462 = vshrl.u32 %v442, 16
        %v464 = vrot.slane %v462, 4
        %v465 = vshll.u32 %v442, 16
        %v467 = vrot.slane %v465, 5
        %v468 = vor.u32 %v464, %v467
        %v469 = vrot.slane %v468, 4
        %v471 = vshll.u32 %v443, 16
        %v473 = vrot.slane %v471, 5
        %v474 = vsel %vm460, %v469, %v473
        %v476 = vshrl.u32 %v444, 16
        %v478 = vrot.slane %v476, 4
        %v479 = vshll.u32 %v444, 16
        %v481 = vrot.slane %v479, 5
        %v482 = vor.u32 %v478, %v481
        %v483 = vrot.slane %v482, 4
        %v485 = vshll.u32 %v445, 16
        %v487 = vrot.slane %v485, 5
        %v488 = vsel %vm460, %v483, %v487
        %v490 = vshrl.u32 %v446, 16
        %v492 = vrot.slane %v490, 4
        %v493 = vshll.u32 %v446, 16
        %v495 = vrot.slane %v493, 5
        %v496 = vor.u32 %v492, %v495
        %v497 = vrot.slane %v496, 4
        %v499 = vshll.u32 %v447, 16
        %v501 = vrot.slane %v499, 5
        %v502 = vsel %vm460, %v497, %v501
        %v504 = vshrl.u32 %v448, 16
        %v506 = vrot.slane %v504, 4
        %v507 = vshll.u32 %v448, 16
        %v509 = vrot.slane %v507, 5
        %v510 = vor.u32 %v506, %v509
        %v511 = vrot.slane %v510, 4
        %v513 = vshll.u32 %v449, 16
        %v515 = vrot.slane %v513, 5
        %v516 = vsel %vm460, %v511, %v515
        %v518 = vshrl.u32 %v450, 16
        %v520 = vrot.slane %v518, 4
        %v521 = vshll.u32 %v450, 16
        %v523 = vrot.slane %v521, 5
        %v524 = vor.u32 %v520, %v523
        %v525 = vrot.slane %v524, 4
        %v527 = vshll.u32 %v451, 16
        %v529 = vrot.slane %v527, 5
        %v530 = vsel %vm460, %v525, %v529
        %v532 = vshrl.u32 %v452, 16
        %v534 = vrot.slane %v532, 4
        %v535 = vshll.u32 %v452, 16
        %v537 = vrot.slane %v535, 5
        %v538 = vor.u32 %v534, %v537
        %v539 = vrot.slane %v538, 4
        %v541 = vshll.u32 %v453, 16
        %v543 = vrot.slane %v541, 5
        %v544 = vsel %vm460, %v539, %v543
        %v546 = vshrl.u32 %v454, 16
        %v548 = vrot.slane %v546, 4
        %v549 = vshll.u32 %v454, 16
        %v551 = vrot.slane %v549, 5
        %v552 = vor.u32 %v548, %v551
        %v553 = vrot.slane %v552, 4
        %v555 = vshll.u32 %v455, 16
        %v557 = vrot.slane %v555, 5
        %v558 = vsel %vm460, %v553, %v557
        %v560 = vshrl.u32 %v456, 16
        %v562 = vrot.slane %v560, 4
        %v563 = vshll.u32 %v456, 16
        %v565 = vrot.slane %v563, 5
        %v566 = vor.u32 %v562, %v565
        %v567 = vrot.slane %v566, 4
        %v569 = vshll.u32 %v457, 16
        %v571 = vrot.slane %v569, 5
        %v572 = vsel %vm460, %v567, %v571
        %s573 = scalar_lea.vmem %s215, 4
        %v574 = vld [vmem:[%s573] sm:$0x3]
        %v575 = vunpack.c.l.b16 %v474
        %v576 = vunpack.c.l.b16 %v488
        %v577 = vunpack.c.l.b16 %v502
        %v578 = vunpack.c.l.b16 %v516
        %v579 = vunpack.c.l.b16 %v530
        %v580 = vunpack.c.l.b16 %v544
        %v581 = vunpack.c.l.b16 %v558
        %v582 = vunpack.c.l.b16 %v572
        %v583 = vpack.c.b16 %v576, %v575
        %v584 = vpack.c.b16 %v578, %v577
        %v585 = vpack.c.b16 %v580, %v579
        %v586 = vpack.c.b16 %v582, %v581
        %v588 = vsel %vm260, %v583, 0
        %v591 = vsel %vm260, %v584, 0
        %v594 = vsel %vm260, %v585, 0
        %v597 = vsel %vm260, %v586, 0
        %v600 = vsel %vm273, %v574, 0
        %602 = vmatprep.subr.bf16.mxu0 0
        %603 = vmatpush1.bf16.msra.mxu0 0
        %604 = vmatprep.subr.bf16.mxu0 0
        %605 = vmatpush1.bf16.msra.mxu0 0
        %606 = vmatprep.subr.bf16.mxu0 0
        %607 = vmatpush1.bf16.msra.mxu0 0
        %608 = vmatprep.subr.bf16.mxu0 0
        %609 = vmatpush1.bf16.msra.mxu0 0
        %610 = vmatprep.subr.bf16.mxu0 0
        %611 = vmatpush1.bf16.msra.mxu0 0
        %612 = vmatprep.subr.bf16.mxu0 0
        %613 = vmatpush1.bf16.msra.mxu0 0
        %614 = vmatprep.subr.bf16.mxu0 0
        %615 = vmatpush1.bf16.msra.mxu0 0
        %616 = vmatprep.subr.bf16.mxu0 0
        %617 = vmatpush1.bf16.msra.mxu0 %v600
        %618 = vmatprep.subr.bf16.mxu0 0
        %619 = vmatpush2.bf16.msra.mxu0 0
        %620 = vmatprep.subr.bf16.mxu0 0
        %621 = vmatpush2.bf16.msra.mxu0 0
        %622 = vmatprep.subr.bf16.mxu0 0
        %623 = vmatpush2.bf16.msra.mxu0 0
        %624 = vmatprep.subr.bf16.mxu0 0
        %625 = vmatpush2.bf16.msra.mxu0 0
        %626 = vmatprep.subr.bf16.mxu0 0
        %627 = vmatpush2.bf16.msra.mxu0 0
        %628 = vmatprep.subr.bf16.mxu0 0
        %629 = vmatpush2.bf16.msra.mxu0 0
        %630 = vmatprep.subr.bf16.mxu0 0
        %631 = vmatpush2.bf16.msra.mxu0 0
        %632 = vmatprep.subr.bf16.mxu0 0
        %633 = vmatpush2.bf16.msra.mxu0 0
        %634 = vmatprep.mubr.bf16.mxu0 0
        %635 = vmatmul.mubr.bf16.gmra.mxu0 %v588
        %v636 = vpop.f32.mrf.mxu0
        %v637 = vadd.f32 0.0, %v636
        %v638 = vpop.f32.mrf.mxu0
        %v639 = vpop.f32.mrf.mxu0
        %v640 = vadd.f32 0.0, %v639
        %v641 = vpop.f32.mrf.mxu0
        %642 = vmatprep.mubr.bf16.mxu0 0
        %643 = vmatmul.mubr.bf16.gmra.mxu0 %v591
        %v644 = vpop.f32.mrf.mxu0
        %v645 = vadd.f32 0.0, %v644
        %v646 = vpop.f32.mrf.mxu0
        %v647 = vpop.f32.mrf.mxu0
        %v648 = vadd.f32 0.0, %v647
        %v649 = vpop.f32.mrf.mxu0
        %650 = vmatprep.mubr.bf16.mxu0 0
        %651 = vmatmul.mubr.bf16.gmra.mxu0 %v594
        %v652 = vpop.f32.mrf.mxu0
        %v653 = vadd.f32 0.0, %v652
        %v654 = vpop.f32.mrf.mxu0
        %v655 = vpop.f32.mrf.mxu0
        %v656 = vadd.f32 0.0, %v655
        %v657 = vpop.f32.mrf.mxu0
        %658 = vmatprep.mubr.bf16.mxu0 0
        %659 = vmatmul.mubr.bf16.gmra.mxu0 %v597
        %v660 = vpop.f32.mrf.mxu0
        %v661 = vadd.f32 0.0, %v660
        %v662 = vpop.f32.mrf.mxu0
        %v663 = vpop.f32.mrf.mxu0
        %v664 = vadd.f32 0.0, %v663
        %v665 = vpop.f32.mrf.mxu0
        %666 = vdwg.mxu0
        %v667 = vadd.f32 %v412, %v637
        %v668 = vadd.f32 %v415, %v640
        %v669 = vadd.f32 %v420, %v645
        %v670 = vadd.f32 %v423, %v648
        %v671 = vadd.f32 %v428, %v653
        %v672 = vadd.f32 %v431, %v656
        %v673 = vadd.f32 %v436, %v661
        %v674 = vadd.f32 %v439, %v664
        %s675 = scalar_lea.vmem %s210, 144
        %v676 = vld [vmem:[%s675] sm:$0xf]
        %v677 = vld [vmem:[%s675 + $0x8] sm:$0xf]
        %v678 = vld [vmem:[%s675 + $0x10] sm:$0xf]
        %v679 = vld [vmem:[%s675 + $0x18] sm:$0xf]
        %v680 = vld [vmem:[%s675 + $0x20] sm:$0xf]
        %v681 = vld [vmem:[%s675 + $0x28] sm:$0xf]
        %v682 = vld [vmem:[%s675 + $0x30] sm:$0xf]
        %v683 = vld [vmem:[%s675 + $0x38] sm:$0xf]
        %s684 = scalar_lea.vmem %s215, 6
        %v685 = vld [vmem:[%s684] sm:$0x3]
        %v694 = vunpack.c.l.b16 %v676
        %v695 = vunpack.c.l.b16 %v677
        %v696 = vunpack.c.l.b16 %v678
        %v697 = vunpack.c.l.b16 %v679
        %v698 = vunpack.c.l.b16 %v680
        %v699 = vunpack.c.l.b16 %v681
        %v700 = vunpack.c.l.b16 %v682
        %v701 = vunpack.c.l.b16 %v683
        %v702 = vpack.c.b16 %v695, %v694
        %v703 = vpack.c.b16 %v697, %v696
        %v704 = vpack.c.b16 %v699, %v698
        %v705 = vpack.c.b16 %v701, %v700
        %v707 = vsel %vm260, %v702, 0
        %v710 = vsel %vm260, %v703, 0
        %v713 = vsel %vm260, %v704, 0
        %v716 = vsel %vm260, %v705, 0
        %v719 = vsel %vm273, %v685, 0
        %721 = vmatprep.subr.bf16.mxu0 0
        %722 = vmatpush1.bf16.msra.mxu0 0
        %723 = vmatprep.subr.bf16.mxu0 0
        %724 = vmatpush1.bf16.msra.mxu0 0
        %725 = vmatprep.subr.bf16.mxu0 0
        %726 = vmatpush1.bf16.msra.mxu0 0
        %727 = vmatprep.subr.bf16.mxu0 0
        %728 = vmatpush1.bf16.msra.mxu0 0
        %729 = vmatprep.subr.bf16.mxu0 0
        %730 = vmatpush1.bf16.msra.mxu0 0
        %731 = vmatprep.subr.bf16.mxu0 0
        %732 = vmatpush1.bf16.msra.mxu0 0
        %733 = vmatprep.subr.bf16.mxu0 0
        %734 = vmatpush1.bf16.msra.mxu0 0
        %735 = vmatprep.subr.bf16.mxu0 0
        %736 = vmatpush1.bf16.msra.mxu0 %v719
        %737 = vmatprep.subr.bf16.mxu0 0
        %738 = vmatpush2.bf16.msra.mxu0 0
        %739 = vmatprep.subr.bf16.mxu0 0
        %740 = vmatpush2.bf16.msra.mxu0 0
        %741 = vmatprep.subr.bf16.mxu0 0
        %742 = vmatpush2.bf16.msra.mxu0 0
        %743 = vmatprep.subr.bf16.mxu0 0
        %744 = vmatpush2.bf16.msra.mxu0 0
        %745 = vmatprep.subr.bf16.mxu0 0
        %746 = vmatpush2.bf16.msra.mxu0 0
        %747 = vmatprep.subr.bf16.mxu0 0
        %748 = vmatpush2.bf16.msra.mxu0 0
        %749 = vmatprep.subr.bf16.mxu0 0
        %750 = vmatpush2.bf16.msra.mxu0 0
        %751 = vmatprep.subr.bf16.mxu0 0
        %752 = vmatpush2.bf16.msra.mxu0 0
        %753 = vmatprep.mubr.bf16.mxu0 0
        %754 = vmatmul.mubr.bf16.gmra.mxu0 %v707
        %v755 = vpop.f32.mrf.mxu0
        %v756 = vadd.f32 0.0, %v755
        %v757 = vpop.f32.mrf.mxu0
        %v758 = vpop.f32.mrf.mxu0
        %v759 = vadd.f32 0.0, %v758
        %v760 = vpop.f32.mrf.mxu0
        %761 = vmatprep.mubr.bf16.mxu0 0
        %762 = vmatmul.mubr.bf16.gmra.mxu0 %v710
        %v763 = vpop.f32.mrf.mxu0
        %v764 = vadd.f32 0.0, %v763
        %v765 = vpop.f32.mrf.mxu0
        %v766 = vpop.f32.mrf.mxu0
        %v767 = vadd.f32 0.0, %v766
        %v768 = vpop.f32.mrf.mxu0
        %769 = vmatprep.mubr.bf16.mxu0 0
        %770 = vmatmul.mubr.bf16.gmra.mxu0 %v713
        %v771 = vpop.f32.mrf.mxu0
        %v772 = vadd.f32 0.0, %v771
        %v773 = vpop.f32.mrf.mxu0
        %v774 = vpop.f32.mrf.mxu0
        %v775 = vadd.f32 0.0, %v774
        %v776 = vpop.f32.mrf.mxu0
        %777 = vmatprep.mubr.bf16.mxu0 0
        %778 = vmatmul.mubr.bf16.gmra.mxu0 %v716
        %v779 = vpop.f32.mrf.mxu0
        %v780 = vadd.f32 0.0, %v779
        %v781 = vpop.f32.mrf.mxu0
        %v782 = vpop.f32.mrf.mxu0
        %v783 = vadd.f32 0.0, %v782
        %v784 = vpop.f32.mrf.mxu0
        %785 = vdwg.mxu0
        %v786 = vadd.f32 %v667, %v756
        %v787 = vadd.f32 %v668, %v759
        %v788 = vadd.f32 %v669, %v764
        %v789 = vadd.f32 %v670, %v767
        %v790 = vadd.f32 %v671, %v772
        %v791 = vadd.f32 %v672, %v775
        %v792 = vadd.f32 %v673, %v780
        %v793 = vadd.f32 %v674, %v783
        %s794 = scalar_lea.vmem %s210, 216
        %v795 = vld [vmem:[%s794] sm:$0xf]
        %v796 = vld [vmem:[%s794 + $0x8] sm:$0xf]
        %v797 = vld [vmem:[%s794 + $0x10] sm:$0xf]
        %v798 = vld [vmem:[%s794 + $0x18] sm:$0xf]
        %v799 = vld [vmem:[%s794 + $0x20] sm:$0xf]
        %v800 = vld [vmem:[%s794 + $0x28] sm:$0xf]
        %v801 = vld [vmem:[%s794 + $0x30] sm:$0xf]
        %v802 = vld [vmem:[%s794 + $0x38] sm:$0xf]
        %s803 = scalar_lea.vmem %s215, 8
        %v804 = vld [vmem:[%s803] sm:$0x3]
        %v813 = vunpack.c.l.b16 %v795
        %v814 = vunpack.c.l.b16 %v796
        %v815 = vunpack.c.l.b16 %v797
        %v816 = vunpack.c.l.b16 %v798
        %v817 = vunpack.c.l.b16 %v799
        %v818 = vunpack.c.l.b16 %v800
        %v819 = vunpack.c.l.b16 %v801
        %v820 = vunpack.c.l.b16 %v802
        %v821 = vpack.c.b16 %v814, %v813
        %v822 = vpack.c.b16 %v816, %v815
        %v823 = vpack.c.b16 %v818, %v817
        %v824 = vpack.c.b16 %v820, %v819
        %v826 = vsel %vm260, %v821, 0
        %v829 = vsel %vm260, %v822, 0
        %v832 = vsel %vm260, %v823, 0
        %v835 = vsel %vm260, %v824, 0
        %v838 = vsel %vm273, %v804, 0
        %840 = vmatprep.subr.bf16.mxu0 0
        %841 = vmatpush1.bf16.msra.mxu0 0
        %842 = vmatprep.subr.bf16.mxu0 0
        %843 = vmatpush1.bf16.msra.mxu0 0
        %844 = vmatprep.subr.bf16.mxu0 0
        %845 = vmatpush1.bf16.msra.mxu0 0
        %846 = vmatprep.subr.bf16.mxu0 0
        %847 = vmatpush1.bf16.msra.mxu0 0
        %848 = vmatprep.subr.bf16.mxu0 0
        %849 = vmatpush1.bf16.msra.mxu0 0
        %850 = vmatprep.subr.bf16.mxu0 0
        %851 = vmatpush1.bf16.msra.mxu0 0
        %852 = vmatprep.subr.bf16.mxu0 0
        %853 = vmatpush1.bf16.msra.mxu0 0
        %854 = vmatprep.subr.bf16.mxu0 0
        %855 = vmatpush1.bf16.msra.mxu0 %v838
        %856 = vmatprep.subr.bf16.mxu0 0
        %857 = vmatpush2.bf16.msra.mxu0 0
        %858 = vmatprep.subr.bf16.mxu0 0
        %859 = vmatpush2.bf16.msra.mxu0 0
        %860 = vmatprep.subr.bf16.mxu0 0
        %861 = vmatpush2.bf16.msra.mxu0 0
        %862 = vmatprep.subr.bf16.mxu0 0
        %863 = vmatpush2.bf16.msra.mxu0 0
        %864 = vmatprep.subr.bf16.mxu0 0
        %865 = vmatpush2.bf16.msra.mxu0 0
        %866 = vmatprep.subr.bf16.mxu0 0
        %867 = vmatpush2.bf16.msra.mxu0 0
        %868 = vmatprep.subr.bf16.mxu0 0
        %869 = vmatpush2.bf16.msra.mxu0 0
        %870 = vmatprep.subr.bf16.mxu0 0
        %871 = vmatpush2.bf16.msra.mxu0 0
        %872 = vmatprep.mubr.bf16.mxu0 0
        %873 = vmatmul.mubr.bf16.gmra.mxu0 %v826
        %v874 = vpop.f32.mrf.mxu0
        %v875 = vadd.f32 0.0, %v874
        %v876 = vpop.f32.mrf.mxu0
        %v877 = vpop.f32.mrf.mxu0
        %v878 = vadd.f32 0.0, %v877
        %v879 = vpop.f32.mrf.mxu0
        %880 = vmatprep.mubr.bf16.mxu0 0
        %881 = vmatmul.mubr.bf16.gmra.mxu0 %v829
        %v882 = vpop.f32.mrf.mxu0
        %v883 = vadd.f32 0.0, %v882
        %v884 = vpop.f32.mrf.mxu0
        %v885 = vpop.f32.mrf.mxu0
        %v886 = vadd.f32 0.0, %v885
        %v887 = vpop.f32.mrf.mxu0
        %888 = vmatprep.mubr.bf16.mxu0 0
        %889 = vmatmul.mubr.bf16.gmra.mxu0 %v832
        %v890 = vpop.f32.mrf.mxu0
        %v891 = vadd.f32 0.0, %v890
        %v892 = vpop.f32.mrf.mxu0
        %v893 = vpop.f32.mrf.mxu0
        %v894 = vadd.f32 0.0, %v893
        %v895 = vpop.f32.mrf.mxu0
        %896 = vmatprep.mubr.bf16.mxu0 0
        %897 = vmatmul.mubr.bf16.gmra.mxu0 %v835
        %v898 = vpop.f32.mrf.mxu0
        %v899 = vadd.f32 0.0, %v898
        %v900 = vpop.f32.mrf.mxu0
        %v901 = vpop.f32.mrf.mxu0
        %v902 = vadd.f32 0.0, %v901
        %v903 = vpop.f32.mrf.mxu0
        %904 = vdwg.mxu0
        %v905 = vadd.f32 %v786, %v875
        %v906 = vadd.f32 %v787, %v878
        %v907 = vadd.f32 %v788, %v883
        %v908 = vadd.f32 %v789, %v886
        %v909 = vadd.f32 %v790, %v891
        %v910 = vadd.f32 %v791, %v894
        %v911 = vadd.f32 %v792, %v899
        %v912 = vadd.f32 %v793, %v902
        %v913 = vld [vmem:[%s675] sm:$0xf]
        %v914 = vld [vmem:[%s675 + $0x4] sm:$0x1]
        %v915 = vld [vmem:[%s675 + $0x8] sm:$0xf]
        %v916 = vld [vmem:[%s675 + $0xc] sm:$0x1]
        %v917 = vld [vmem:[%s675 + $0x10] sm:$0xf]
        %v918 = vld [vmem:[%s675 + $0x14] sm:$0x1]
        %v919 = vld [vmem:[%s675 + $0x18] sm:$0xf]
        %v920 = vld [vmem:[%s675 + $0x1c] sm:$0x1]
        %v921 = vld [vmem:[%s675 + $0x20] sm:$0xf]
        %v922 = vld [vmem:[%s675 + $0x24] sm:$0x1]
        %v923 = vld [vmem:[%s675 + $0x28] sm:$0xf]
        %v924 = vld [vmem:[%s675 + $0x2c] sm:$0x1]
        %v925 = vld [vmem:[%s675 + $0x30] sm:$0xf]
        %v926 = vld [vmem:[%s675 + $0x34] sm:$0x1]
        %v927 = vld [vmem:[%s675 + $0x38] sm:$0xf]
        %v928 = vld [vmem:[%s675 + $0x3c] sm:$0x1]
        %v930 = vshrl.u32 %v913, 16
        %v932 = vrot.slane %v930, 4
        %v933 = vshll.u32 %v913, 16
        %v935 = vrot.slane %v933, 5
        %v936 = vor.u32 %v932, %v935
        %v937 = vrot.slane %v936, 4
        %v939 = vshll.u32 %v914, 16
        %v941 = vrot.slane %v939, 5
        %v942 = vsel %vm460, %v937, %v941
        %v944 = vshrl.u32 %v915, 16
        %v946 = vrot.slane %v944, 4
        %v947 = vshll.u32 %v915, 16
        %v949 = vrot.slane %v947, 5
        %v950 = vor.u32 %v946, %v949
        %v951 = vrot.slane %v950, 4
        %v953 = vshll.u32 %v916, 16
        %v955 = vrot.slane %v953, 5
        %v956 = vsel %vm460, %v951, %v955
        %v958 = vshrl.u32 %v917, 16
        %v960 = vrot.slane %v958, 4
        %v961 = vshll.u32 %v917, 16
        %v963 = vrot.slane %v961, 5
        %v964 = vor.u32 %v960, %v963
        %v965 = vrot.slane %v964, 4
        %v967 = vshll.u32 %v918, 16
        %v969 = vrot.slane %v967, 5
        %v970 = vsel %vm460, %v965, %v969
        %v972 = vshrl.u32 %v919, 16
        %v974 = vrot.slane %v972, 4
        %v975 = vshll.u32 %v919, 16
        %v977 = vrot.slane %v975, 5
        %v978 = vor.u32 %v974, %v977
        %v979 = vrot.slane %v978, 4
        %v981 = vshll.u32 %v920, 16
        %v983 = vrot.slane %v981, 5
        %v984 = vsel %vm460, %v979, %v983
        %v986 = vshrl.u32 %v921, 16
        %v988 = vrot.slane %v986, 4
        %v989 = vshll.u32 %v921, 16
        %v991 = vrot.slane %v989, 5
        %v992 = vor.u32 %v988, %v991
        %v993 = vrot.slane %v992, 4
        %v995 = vshll.u32 %v922, 16
        %v997 = vrot.slane %v995, 5
        %v998 = vsel %vm460, %v993, %v997
        %v1000 = vshrl.u32 %v923, 16
        %v1002 = vrot.slane %v1000, 4
        %v1003 = vshll.u32 %v923, 16
        %v1005 = vrot.slane %v1003, 5
        %v1006 = vor.u32 %v1002, %v1005
        %v1007 = vrot.slane %v1006, 4
        %v1009 = vshll.u32 %v924, 16
        %v1011 = vrot.slane %v1009, 5
        %v1012 = vsel %vm460, %v1007, %v1011
        %v1014 = vshrl.u32 %v925, 16
        %v1016 = vrot.slane %v1014, 4
        %v1017 = vshll.u32 %v925, 16
        %v1019 = vrot.slane %v1017, 5
        %v1020 = vor.u32 %v1016, %v1019
        %v1021 = vrot.slane %v1020, 4
        %v1023 = vshll.u32 %v926, 16
        %v1025 = vrot.slane %v1023, 5
        %v1026 = vsel %vm460, %v1021, %v1025
        %v1028 = vshrl.u32 %v927, 16
        %v1030 = vrot.slane %v1028, 4
        %v1031 = vshll.u32 %v927, 16
        %v1033 = vrot.slane %v1031, 5
        %v1034 = vor.u32 %v1030, %v1033
        %v1035 = vrot.slane %v1034, 4
        %v1037 = vshll.u32 %v928, 16
        %v1039 = vrot.slane %v1037, 5
        %v1040 = vsel %vm460, %v1035, %v1039
        %s1041 = scalar_lea.vmem %s215, 10
        %v1042 = vld [vmem:[%s1041] sm:$0x3]
        %v1043 = vunpack.c.l.b16 %v942
        %v1044 = vunpack.c.l.b16 %v956
        %v1045 = vunpack.c.l.b16 %v970
        %v1046 = vunpack.c.l.b16 %v984
        %v1047 = vunpack.c.l.b16 %v998
        %v1048 = vunpack.c.l.b16 %v1012
        %v1049 = vunpack.c.l.b16 %v1026
        %v1050 = vunpack.c.l.b16 %v1040
        %v1051 = vpack.c.b16 %v1044, %v1043
        %v1052 = vpack.c.b16 %v1046, %v1045
        %v1053 = vpack.c.b16 %v1048, %v1047
        %v1054 = vpack.c.b16 %v1050, %v1049
        %v1056 = vsel %vm260, %v1051, 0
        %v1059 = vsel %vm260, %v1052, 0
        %v1062 = vsel %vm260, %v1053, 0
        %v1065 = vsel %vm260, %v1054, 0
        %v1068 = vsel %vm273, %v1042, 0
        %1070 = vmatprep.subr.bf16.mxu0 0
        %1071 = vmatpush1.bf16.msra.mxu0 0
        %1072 = vmatprep.subr.bf16.mxu0 0
        %1073 = vmatpush1.bf16.msra.mxu0 0
        %1074 = vmatprep.subr.bf16.mxu0 0
        %1075 = vmatpush1.bf16.msra.mxu0 0
        %1076 = vmatprep.subr.bf16.mxu0 0
        %1077 = vmatpush1.bf16.msra.mxu0 0
        %1078 = vmatprep.subr.bf16.mxu0 0
        %1079 = vmatpush1.bf16.msra.mxu0 0
        %1080 = vmatprep.subr.bf16.mxu0 0
        %1081 = vmatpush1.bf16.msra.mxu0 0
        %1082 = vmatprep.subr.bf16.mxu0 0
        %1083 = vmatpush1.bf16.msra.mxu0 0
        %1084 = vmatprep.subr.bf16.mxu0 0
        %1085 = vmatpush1.bf16.msra.mxu0 %v1068
        %1086 = vmatprep.subr.bf16.mxu0 0
        %1087 = vmatpush2.bf16.msra.mxu0 0
        %1088 = vmatprep.subr.bf16.mxu0 0
        %1089 = vmatpush2.bf16.msra.mxu0 0
        %1090 = vmatprep.subr.bf16.mxu0 0
        %1091 = vmatpush2.bf16.msra.mxu0 0
        %1092 = vmatprep.subr.bf16.mxu0 0
        %1093 = vmatpush2.bf16.msra.mxu0 0
        %1094 = vmatprep.subr.bf16.mxu0 0
        %1095 = vmatpush2.bf16.msra.mxu0 0
        %1096 = vmatprep.subr.bf16.mxu0 0
        %1097 = vmatpush2.bf16.msra.mxu0 0
        %1098 = vmatprep.subr.bf16.mxu0 0
        %1099 = vmatpush2.bf16.msra.mxu0 0
        %1100 = vmatprep.subr.bf16.mxu0 0
        %1101 = vmatpush2.bf16.msra.mxu0 0
        %1102 = vmatprep.mubr.bf16.mxu0 0
        %1103 = vmatmul.mubr.bf16.gmra.mxu0 %v1056
        %v1104 = vpop.f32.mrf.mxu0
        %v1105 = vadd.f32 0.0, %v1104
        %v1106 = vpop.f32.mrf.mxu0
        %v1107 = vpop.f32.mrf.mxu0
        %v1108 = vadd.f32 0.0, %v1107
        %v1109 = vpop.f32.mrf.mxu0
        %1110 = vmatprep.mubr.bf16.mxu0 0
        %1111 = vmatmul.mubr.bf16.gmra.mxu0 %v1059
        %v1112 = vpop.f32.mrf.mxu0
        %v1113 = vadd.f32 0.0, %v1112
        %v1114 = vpop.f32.mrf.mxu0
        %v1115 = vpop.f32.mrf.mxu0
        %v1116 = vadd.f32 0.0, %v1115
        %v1117 = vpop.f32.mrf.mxu0
        %1118 = vmatprep.mubr.bf16.mxu0 0
        %1119 = vmatmul.mubr.bf16.gmra.mxu0 %v1062
        %v1120 = vpop.f32.mrf.mxu0
        %v1121 = vadd.f32 0.0, %v1120
        %v1122 = vpop.f32.mrf.mxu0
        %v1123 = vpop.f32.mrf.mxu0
        %v1124 = vadd.f32 0.0, %v1123
        %v1125 = vpop.f32.mrf.mxu0
        %1126 = vmatprep.mubr.bf16.mxu0 0
        %1127 = vmatmul.mubr.bf16.gmra.mxu0 %v1065
        %v1128 = vpop.f32.mrf.mxu0
        %v1129 = vadd.f32 0.0, %v1128
        %v1130 = vpop.f32.mrf.mxu0
        %v1131 = vpop.f32.mrf.mxu0
        %v1132 = vadd.f32 0.0, %v1131
        %v1133 = vpop.f32.mrf.mxu0
        %1134 = vdwg.mxu0
        %v1135 = vadd.f32 %v905, %v1105
        %v1136 = vadd.f32 %v906, %v1108
        %v1137 = vadd.f32 %v907, %v1113
        %v1138 = vadd.f32 %v908, %v1116
        %v1139 = vadd.f32 %v909, %v1121
        %v1140 = vadd.f32 %v910, %v1124
        %v1141 = vadd.f32 %v911, %v1129
        %v1142 = vadd.f32 %v912, %v1132
        %s1143 = scalar_lea.vmem %s210, 8
        %v1144 = vld [vmem:[%s1143] sm:$0xf]
        %v1145 = vld [vmem:[%s1143 + $0x8] sm:$0xf]
        %v1146 = vld [vmem:[%s1143 + $0x10] sm:$0xf]
        %v1147 = vld [vmem:[%s1143 + $0x18] sm:$0xf]
        %v1148 = vld [vmem:[%s1143 + $0x20] sm:$0xf]
        %v1149 = vld [vmem:[%s1143 + $0x28] sm:$0xf]
        %v1150 = vld [vmem:[%s1143 + $0x30] sm:$0xf]
        %v1151 = vld [vmem:[%s1143 + $0x38] sm:$0xf]
        %s1152 = scalar_lea.vmem %s215, 12
        %v1153 = vld [vmem:[%s1152] sm:$0x3]
        %v1162 = vunpack.c.l.b16 %v1144
        %v1163 = vunpack.c.l.b16 %v1145
        %v1164 = vunpack.c.l.b16 %v1146
        %v1165 = vunpack.c.l.b16 %v1147
        %v1166 = vunpack.c.l.b16 %v1148
        %v1167 = vunpack.c.l.b16 %v1149
        %v1168 = vunpack.c.l.b16 %v1150
        %v1169 = vunpack.c.l.b16 %v1151
        %v1170 = vpack.c.b16 %v1163, %v1162
        %v1171 = vpack.c.b16 %v1165, %v1164
        %v1172 = vpack.c.b16 %v1167, %v1166
        %v1173 = vpack.c.b16 %v1169, %v1168
        %v1175 = vsel %vm260, %v1170, 0
        %v1178 = vsel %vm260, %v1171, 0
        %v1181 = vsel %vm260, %v1172, 0
        %v1184 = vsel %vm260, %v1173, 0
        %v1187 = vsel %vm273, %v1153, 0
        %1189 = vmatprep.subr.bf16.mxu0 0
        %1190 = vmatpush1.bf16.msra.mxu0 0
        %1191 = vmatprep.subr.bf16.mxu0 0
        %1192 = vmatpush1.bf16.msra.mxu0 0
        %1193 = vmatprep.subr.bf16.mxu0 0
        %1194 = vmatpush1.bf16.msra.mxu0 0
        %1195 = vmatprep.subr.bf16.mxu0 0
        %1196 = vmatpush1.bf16.msra.mxu0 0
        %1197 = vmatprep.subr.bf16.mxu0 0
        %1198 = vmatpush1.bf16.msra.mxu0 0
        %1199 = vmatprep.subr.bf16.mxu0 0
        %1200 = vmatpush1.bf16.msra.mxu0 0
        %1201 = vmatprep.subr.bf16.mxu0 0
        %1202 = vmatpush1.bf16.msra.mxu0 0
        %1203 = vmatprep.subr.bf16.mxu0 0
        %1204 = vmatpush1.bf16.msra.mxu0 %v1187
        %1205 = vmatprep.subr.bf16.mxu0 0
        %1206 = vmatpush2.bf16.msra.mxu0 0
        %1207 = vmatprep.subr.bf16.mxu0 0
        %1208 = vmatpush2.bf16.msra.mxu0 0
        %1209 = vmatprep.subr.bf16.mxu0 0
        %1210 = vmatpush2.bf16.msra.mxu0 0
        %1211 = vmatprep.subr.bf16.mxu0 0
        %1212 = vmatpush2.bf16.msra.mxu0 0
        %1213 = vmatprep.subr.bf16.mxu0 0
        %1214 = vmatpush2.bf16.msra.mxu0 0
        %1215 = vmatprep.subr.bf16.mxu0 0
        %1216 = vmatpush2.bf16.msra.mxu0 0
        %1217 = vmatprep.subr.bf16.mxu0 0
        %1218 = vmatpush2.bf16.msra.mxu0 0
        %1219 = vmatprep.subr.bf16.mxu0 0
        %1220 = vmatpush2.bf16.msra.mxu0 0
        %1221 = vmatprep.mubr.bf16.mxu0 0
        %1222 = vmatmul.mubr.bf16.gmra.mxu0 %v1175
        %v1223 = vpop.f32.mrf.mxu0
        %v1224 = vadd.f32 0.0, %v1223
        %v1225 = vpop.f32.mrf.mxu0
        %v1226 = vpop.f32.mrf.mxu0
        %v1227 = vadd.f32 0.0, %v1226
        %v1228 = vpop.f32.mrf.mxu0
        %1229 = vmatprep.mubr.bf16.mxu0 0
        %1230 = vmatmul.mubr.bf16.gmra.mxu0 %v1178
        %v1231 = vpop.f32.mrf.mxu0
        %v1232 = vadd.f32 0.0, %v1231
        %v1233 = vpop.f32.mrf.mxu0
        %v1234 = vpop.f32.mrf.mxu0
        %v1235 = vadd.f32 0.0, %v1234
        %v1236 = vpop.f32.mrf.mxu0
        %1237 = vmatprep.mubr.bf16.mxu0 0
        %1238 = vmatmul.mubr.bf16.gmra.mxu0 %v1181
        %v1239 = vpop.f32.mrf.mxu0
        %v1240 = vadd.f32 0.0, %v1239
        %v1241 = vpop.f32.mrf.mxu0
        %v1242 = vpop.f32.mrf.mxu0
        %v1243 = vadd.f32 0.0, %v1242
        %v1244 = vpop.f32.mrf.mxu0
        %1245 = vmatprep.mubr.bf16.mxu0 0
        %1246 = vmatmul.mubr.bf16.gmra.mxu0 %v1184
        %v1247 = vpop.f32.mrf.mxu0
        %v1248 = vadd.f32 0.0, %v1247
        %v1249 = vpop.f32.mrf.mxu0
        %v1250 = vpop.f32.mrf.mxu0
        %v1251 = vadd.f32 0.0, %v1250
        %v1252 = vpop.f32.mrf.mxu0
        %1253 = vdwg.mxu0
        %v1254 = vadd.f32 %v1135, %v1224
        %v1255 = vadd.f32 %v1136, %v1227
        %v1256 = vadd.f32 %v1137, %v1232
        %v1257 = vadd.f32 %v1138, %v1235
        %v1258 = vadd.f32 %v1139, %v1240
        %v1259 = vadd.f32 %v1140, %v1243
        %v1260 = vadd.f32 %v1141, %v1248
        %v1261 = vadd.f32 %v1142, %v1251
        %s1262 = scalar_lea.vmem %s210, 80
        %v1263 = vld [vmem:[%s1262] sm:$0xf]
        %v1264 = vld [vmem:[%s1262 + $0x8] sm:$0xf]
        %v1265 = vld [vmem:[%s1262 + $0x10] sm:$0xf]
        %v1266 = vld [vmem:[%s1262 + $0x18] sm:$0xf]
        %v1267 = vld [vmem:[%s1262 + $0x20] sm:$0xf]
        %v1268 = vld [vmem:[%s1262 + $0x28] sm:$0xf]
        %v1269 = vld [vmem:[%s1262 + $0x30] sm:$0xf]
        %v1270 = vld [vmem:[%s1262 + $0x38] sm:$0xf]
        %s1271 = scalar_lea.vmem %s215, 14
        %v1272 = vld [vmem:[%s1271] sm:$0x3]
        %v1281 = vunpack.c.l.b16 %v1263
        %v1282 = vunpack.c.l.b16 %v1264
        %v1283 = vunpack.c.l.b16 %v1265
        %v1284 = vunpack.c.l.b16 %v1266
        %v1285 = vunpack.c.l.b16 %v1267
        %v1286 = vunpack.c.l.b16 %v1268
        %v1287 = vunpack.c.l.b16 %v1269
        %v1288 = vunpack.c.l.b16 %v1270
        %v1289 = vpack.c.b16 %v1282, %v1281
        %v1290 = vpack.c.b16 %v1284, %v1283
        %v1291 = vpack.c.b16 %v1286, %v1285
        %v1292 = vpack.c.b16 %v1288, %v1287
        %v1294 = vsel %vm260, %v1289, 0
        %v1297 = vsel %vm260, %v1290, 0
        %v1300 = vsel %vm260, %v1291, 0
        %v1303 = vsel %vm260, %v1292, 0
        %v1306 = vsel %vm273, %v1272, 0
        %1308 = vmatprep.subr.bf16.mxu0 0
        %1309 = vmatpush1.bf16.msra.mxu0 0
        %1310 = vmatprep.subr.bf16.mxu0 0
        %1311 = vmatpush1.bf16.msra.mxu0 0
        %1312 = vmatprep.subr.bf16.mxu0 0
        %1313 = vmatpush1.bf16.msra.mxu0 0
        %1314 = vmatprep.subr.bf16.mxu0 0
        %1315 = vmatpush1.bf16.msra.mxu0 0
        %1316 = vmatprep.subr.bf16.mxu0 0
        %1317 = vmatpush1.bf16.msra.mxu0 0
        %1318 = vmatprep.subr.bf16.mxu0 0
        %1319 = vmatpush1.bf16.msra.mxu0 0
        %1320 = vmatprep.subr.bf16.mxu0 0
        %1321 = vmatpush1.bf16.msra.mxu0 0
        %1322 = vmatprep.subr.bf16.mxu0 0
        %1323 = vmatpush1.bf16.msra.mxu0 %v1306
        %1324 = vmatprep.subr.bf16.mxu0 0
        %1325 = vmatpush2.bf16.msra.mxu0 0
        %1326 = vmatprep.subr.bf16.mxu0 0
        %1327 = vmatpush2.bf16.msra.mxu0 0
        %1328 = vmatprep.subr.bf16.mxu0 0
        %1329 = vmatpush2.bf16.msra.mxu0 0
        %1330 = vmatprep.subr.bf16.mxu0 0
        %1331 = vmatpush2.bf16.msra.mxu0 0
        %1332 = vmatprep.subr.bf16.mxu0 0
        %1333 = vmatpush2.bf16.msra.mxu0 0
        %1334 = vmatprep.subr.bf16.mxu0 0
        %1335 = vmatpush2.bf16.msra.mxu0 0
        %1336 = vmatprep.subr.bf16.mxu0 0
        %1337 = vmatpush2.bf16.msra.mxu0 0
        %1338 = vmatprep.subr.bf16.mxu0 0
        %1339 = vmatpush2.bf16.msra.mxu0 0
        %1340 = vmatprep.mubr.bf16.mxu0 0
        %1341 = vmatmul.mubr.bf16.gmra.mxu0 %v1294
        %v1342 = vpop.f32.mrf.mxu0
        %v1343 = vadd.f32 0.0, %v1342
        %v1344 = vpop.f32.mrf.mxu0
        %v1345 = vpop.f32.mrf.mxu0
        %v1346 = vadd.f32 0.0, %v1345
        %v1347 = vpop.f32.mrf.mxu0
        %1348 = vmatprep.mubr.bf16.mxu0 0
        %1349 = vmatmul.mubr.bf16.gmra.mxu0 %v1297
        %v1350 = vpop.f32.mrf.mxu0
        %v1351 = vadd.f32 0.0, %v1350
        %v1352 = vpop.f32.mrf.mxu0
        %v1353 = vpop.f32.mrf.mxu0
        %v1354 = vadd.f32 0.0, %v1353
        %v1355 = vpop.f32.mrf.mxu0
        %1356 = vmatprep.mubr.bf16.mxu0 0
        %1357 = vmatmul.mubr.bf16.gmra.mxu0 %v1300
        %v1358 = vpop.f32.mrf.mxu0
        %v1359 = vadd.f32 0.0, %v1358
        %v1360 = vpop.f32.mrf.mxu0
        %v1361 = vpop.f32.mrf.mxu0
        %v1362 = vadd.f32 0.0, %v1361
        %v1363 = vpop.f32.mrf.mxu0
        %1364 = vmatprep.mubr.bf16.mxu0 0
        %1365 = vmatmul.mubr.bf16.gmra.mxu0 %v1303
        %v1366 = vpop.f32.mrf.mxu0
        %v1367 = vadd.f32 0.0, %v1366
        %v1368 = vpop.f32.mrf.mxu0
        %v1369 = vpop.f32.mrf.mxu0
        %v1370 = vadd.f32 0.0, %v1369
        %v1371 = vpop.f32.mrf.mxu0
        %1372 = vdwg.mxu0
        %v1373 = vadd.f32 %v1254, %v1343
        %v1374 = vadd.f32 %v1255, %v1346
        %v1375 = vadd.f32 %v1256, %v1351
        %v1376 = vadd.f32 %v1257, %v1354
        %v1377 = vadd.f32 %v1258, %v1359
        %v1378 = vadd.f32 %v1259, %v1362
        %v1379 = vadd.f32 %v1260, %v1367
        %v1380 = vadd.f32 %v1261, %v1370
        %v1381 = vld [vmem:[%s1143] sm:$0xf]
        %v1382 = vld [vmem:[%s1143 + $0x4] sm:$0x1]
        %v1383 = vld [vmem:[%s1143 + $0x8] sm:$0xf]
        %v1384 = vld [vmem:[%s1143 + $0xc] sm:$0x1]
        %v1385 = vld [vmem:[%s1143 + $0x10] sm:$0xf]
        %v1386 = vld [vmem:[%s1143 + $0x14] sm:$0x1]
        %v1387 = vld [vmem:[%s1143 + $0x18] sm:$0xf]
        %v1388 = vld [vmem:[%s1143 + $0x1c] sm:$0x1]
        %v1389 = vld [vmem:[%s1143 + $0x20] sm:$0xf]
        %v1390 = vld [vmem:[%s1143 + $0x24] sm:$0x1]
        %v1391 = vld [vmem:[%s1143 + $0x28] sm:$0xf]
        %v1392 = vld [vmem:[%s1143 + $0x2c] sm:$0x1]
        %v1393 = vld [vmem:[%s1143 + $0x30] sm:$0xf]
        %v1394 = vld [vmem:[%s1143 + $0x34] sm:$0x1]
        %v1395 = vld [vmem:[%s1143 + $0x38] sm:$0xf]
        %v1396 = vld [vmem:[%s1143 + $0x3c] sm:$0x1]
        %v1398 = vshrl.u32 %v1381, 16
        %v1400 = vrot.slane %v1398, 4
        %v1401 = vshll.u32 %v1381, 16
        %v1403 = vrot.slane %v1401, 5
        %v1404 = vor.u32 %v1400, %v1403
        %v1405 = vrot.slane %v1404, 4
        %v1407 = vshll.u32 %v1382, 16
        %v1409 = vrot.slane %v1407, 5
        %v1410 = vsel %vm460, %v1405, %v1409
        %v1412 = vshrl.u32 %v1383, 16
        %v1414 = vrot.slane %v1412, 4
        %v1415 = vshll.u32 %v1383, 16
        %v1417 = vrot.slane %v1415, 5
        %v1418 = vor.u32 %v1414, %v1417
        %v1419 = vrot.slane %v1418, 4
        %v1421 = vshll.u32 %v1384, 16
        %v1423 = vrot.slane %v1421, 5
        %v1424 = vsel %vm460, %v1419, %v1423
        %v1426 = vshrl.u32 %v1385, 16
        %v1428 = vrot.slane %v1426, 4
        %v1429 = vshll.u32 %v1385, 16
        %v1431 = vrot.slane %v1429, 5
        %v1432 = vor.u32 %v1428, %v1431
        %v1433 = vrot.slane %v1432, 4
        %v1435 = vshll.u32 %v1386, 16
        %v1437 = vrot.slane %v1435, 5
        %v1438 = vsel %vm460, %v1433, %v1437
        %v1440 = vshrl.u32 %v1387, 16
        %v1442 = vrot.slane %v1440, 4
        %v1443 = vshll.u32 %v1387, 16
        %v1445 = vrot.slane %v1443, 5
        %v1446 = vor.u32 %v1442, %v1445
        %v1447 = vrot.slane %v1446, 4
        %v1449 = vshll.u32 %v1388, 16
        %v1451 = vrot.slane %v1449, 5
        %v1452 = vsel %vm460, %v1447, %v1451
        %v1454 = vshrl.u32 %v1389, 16
        %v1456 = vrot.slane %v1454, 4
        %v1457 = vshll.u32 %v1389, 16
        %v1459 = vrot.slane %v1457, 5
        %v1460 = vor.u32 %v1456, %v1459
        %v1461 = vrot.slane %v1460, 4
        %v1463 = vshll.u32 %v1390, 16
        %v1465 = vrot.slane %v1463, 5
        %v1466 = vsel %vm460, %v1461, %v1465
        %v1468 = vshrl.u32 %v1391, 16
        %v1470 = vrot.slane %v1468, 4
        %v1471 = vshll.u32 %v1391, 16
        %v1473 = vrot.slane %v1471, 5
        %v1474 = vor.u32 %v1470, %v1473
        %v1475 = vrot.slane %v1474, 4
        %v1477 = vshll.u32 %v1392, 16
        %v1479 = vrot.slane %v1477, 5
        %v1480 = vsel %vm460, %v1475, %v1479
        %v1482 = vshrl.u32 %v1393, 16
        %v1484 = vrot.slane %v1482, 4
        %v1485 = vshll.u32 %v1393, 16
        %v1487 = vrot.slane %v1485, 5
        %v1488 = vor.u32 %v1484, %v1487
        %v1489 = vrot.slane %v1488, 4
        %v1491 = vshll.u32 %v1394, 16
        %v1493 = vrot.slane %v1491, 5
        %v1494 = vsel %vm460, %v1489, %v1493
        %v1496 = vshrl.u32 %v1395, 16
        %v1498 = vrot.slane %v1496, 4
        %v1499 = vshll.u32 %v1395, 16
        %v1501 = vrot.slane %v1499, 5
        %v1502 = vor.u32 %v1498, %v1501
        %v1503 = vrot.slane %v1502, 4
        %v1505 = vshll.u32 %v1396, 16
        %v1507 = vrot.slane %v1505, 5
        %v1508 = vsel %vm460, %v1503, %v1507
        %s1509 = scalar_lea.vmem %s215, 16
        %v1510 = vld [vmem:[%s1509] sm:$0x3]
        %v1511 = vunpack.c.l.b16 %v1410
        %v1512 = vunpack.c.l.b16 %v1424
        %v1513 = vunpack.c.l.b16 %v1438
        %v1514 = vunpack.c.l.b16 %v1452
        %v1515 = vunpack.c.l.b16 %v1466
        %v1516 = vunpack.c.l.b16 %v1480
        %v1517 = vunpack.c.l.b16 %v1494
        %v1518 = vunpack.c.l.b16 %v1508
        %v1519 = vpack.c.b16 %v1512, %v1511
        %v1520 = vpack.c.b16 %v1514, %v1513
        %v1521 = vpack.c.b16 %v1516, %v1515
        %v1522 = vpack.c.b16 %v1518, %v1517
        %v1524 = vsel %vm260, %v1519, 0
        %v1527 = vsel %vm260, %v1520, 0
        %v1530 = vsel %vm260, %v1521, 0
        %v1533 = vsel %vm260, %v1522, 0
        %v1536 = vsel %vm273, %v1510, 0
        %1538 = vmatprep.subr.bf16.mxu0 0
        %1539 = vmatpush1.bf16.msra.mxu0 0
        %1540 = vmatprep.subr.bf16.mxu0 0
        %1541 = vmatpush1.bf16.msra.mxu0 0
        %1542 = vmatprep.subr.bf16.mxu0 0
        %1543 = vmatpush1.bf16.msra.mxu0 0
        %1544 = vmatprep.subr.bf16.mxu0 0
        %1545 = vmatpush1.bf16.msra.mxu0 0
        %1546 = vmatprep.subr.bf16.mxu0 0
        %1547 = vmatpush1.bf16.msra.mxu0 0
        %1548 = vmatprep.subr.bf16.mxu0 0
        %1549 = vmatpush1.bf16.msra.mxu0 0
        %1550 = vmatprep.subr.bf16.mxu0 0
        %1551 = vmatpush1.bf16.msra.mxu0 0
        %1552 = vmatprep.subr.bf16.mxu0 0
        %1553 = vmatpush1.bf16.msra.mxu0 %v1536
        %1554 = vmatprep.subr.bf16.mxu0 0
        %1555 = vmatpush2.bf16.msra.mxu0 0
        %1556 = vmatprep.subr.bf16.mxu0 0
        %1557 = vmatpush2.bf16.msra.mxu0 0
        %1558 = vmatprep.subr.bf16.mxu0 0
        %1559 = vmatpush2.bf16.msra.mxu0 0
        %1560 = vmatprep.subr.bf16.mxu0 0
        %1561 = vmatpush2.bf16.msra.mxu0 0
        %1562 = vmatprep.subr.bf16.mxu0 0
        %1563 = vmatpush2.bf16.msra.mxu0 0
        %1564 = vmatprep.subr.bf16.mxu0 0
        %1565 = vmatpush2.bf16.msra.mxu0 0
        %1566 = vmatprep.subr.bf16.mxu0 0
        %1567 = vmatpush2.bf16.msra.mxu0 0
        %1568 = vmatprep.subr.bf16.mxu0 0
        %1569 = vmatpush2.bf16.msra.mxu0 0
        %1570 = vmatprep.mubr.bf16.mxu0 0
        %1571 = vmatmul.mubr.bf16.gmra.mxu0 %v1524
        %v1572 = vpop.f32.mrf.mxu0
        %v1573 = vadd.f32 0.0, %v1572
        %v1574 = vpop.f32.mrf.mxu0
        %v1575 = vpop.f32.mrf.mxu0
        %v1576 = vadd.f32 0.0, %v1575
        %v1577 = vpop.f32.mrf.mxu0
        %1578 = vmatprep.mubr.bf16.mxu0 0
        %1579 = vmatmul.mubr.bf16.gmra.mxu0 %v1527
        %v1580 = vpop.f32.mrf.mxu0
        %v1581 = vadd.f32 0.0, %v1580
        %v1582 = vpop.f32.mrf.mxu0
        %v1583 = vpop.f32.mrf.mxu0
        %v1584 = vadd.f32 0.0, %v1583
        %v1585 = vpop.f32.mrf.mxu0
        %1586 = vmatprep.mubr.bf16.mxu0 0
        %1587 = vmatmul.mubr.bf16.gmra.mxu0 %v1530
        %v1588 = vpop.f32.mrf.mxu0
        %v1589 = vadd.f32 0.0, %v1588
        %v1590 = vpop.f32.mrf.mxu0
        %v1591 = vpop.f32.mrf.mxu0
        %v1592 = vadd.f32 0.0, %v1591
        %v1593 = vpop.f32.mrf.mxu0
        %1594 = vmatprep.mubr.bf16.mxu0 0
        %1595 = vmatmul.mubr.bf16.gmra.mxu0 %v1533
        %v1596 = vpop.f32.mrf.mxu0
        %v1597 = vadd.f32 0.0, %v1596
        %v1598 = vpop.f32.mrf.mxu0
        %v1599 = vpop.f32.mrf.mxu0
        %v1600 = vadd.f32 0.0, %v1599
        %v1601 = vpop.f32.mrf.mxu0
        %1602 = vdwg.mxu0
        %v1603 = vadd.f32 %v1373, %v1573
        %v1604 = vadd.f32 %v1374, %v1576
        %v1605 = vadd.f32 %v1375, %v1581
        %v1606 = vadd.f32 %v1376, %v1584
        %v1607 = vadd.f32 %v1377, %v1589
        %v1608 = vadd.f32 %v1378, %v1592
        %v1609 = vadd.f32 %v1379, %v1597
        %v1610 = vadd.f32 %v1380, %v1600
        %v1611 = vld [vmem:[%s218] sm:$0x1]
        %v1613 = vlaneseq
        %v1614 = vshrl.u32 %v1613, 7
        %v1615 = vsub.s32 0, %v1614
        %v1616 = vrot.slane %v1611, %v1615
        %v1618 = vadd.f32 %v1603, %v1616
        %v1619 = vadd.f32 %v1604, %v1616
        %v1620 = vadd.f32 %v1605, %v1616
        %v1621 = vadd.f32 %v1606, %v1616
        %v1622 = vadd.f32 %v1607, %v1616
        %v1623 = vadd.f32 %v1608, %v1616
        %v1624 = vadd.f32 %v1609, %v1616
        %v1625 = vadd.f32 %v1610, %v1616
        %v1626 = vmax.f32 %v1618, 0.0
        %v1627 = vmax.f32 %v1619, 0.0
        %v1628 = vmax.f32 %v1620, 0.0
        %v1629 = vmax.f32 %v1621, 0.0
        %v1630 = vmax.f32 %v1622, 0.0
        %v1631 = vmax.f32 %v1623, 0.0
        %v1632 = vmax.f32 %v1624, 0.0
        %v1633 = vmax.f32 %v1625, 0.0
        %v1634 = vpack.c.bf16 %v1627, %v1626
        %v1635 = vpack.c.bf16 %v1629, %v1628
        %v1636 = vpack.c.bf16 %v1631, %v1630
        %v1637 = vpack.c.bf16 %v1633, %v1632
        %v1642 = vunpack.c.l.b16 %v1634
        %v1643 = vunpack.c.h.b16 %v1634
        %v1644 = vunpack.c.l.b16 %v1635
        %v1645 = vunpack.c.h.b16 %v1635
        %v1646 = vunpack.c.l.b16 %v1636
        %v1647 = vunpack.c.h.b16 %v1636
        %v1648 = vunpack.c.l.b16 %v1637
        %v1649 = vunpack.c.h.b16 %v1637
        %v1650 = vpack.c.b16 %v1642, %v1642
        %v1651 = vpack.c.b16 %v1643, %v1643
        %v1652 = vpack.c.b16 %v1644, %v1644
        %v1653 = vpack.c.b16 %v1645, %v1645
        %v1654 = vpack.c.b16 %v1646, %v1646
        %v1655 = vpack.c.b16 %v1647, %v1647
        %v1656 = vpack.c.b16 %v1648, %v1648
        %v1657 = vpack.c.b16 %v1649, %v1649
        %1666 = vst [vmem:[%s204] sm:$0xf] %v1650
        %1667 = vst [vmem:[%s204 + $0x4] sm:$0xf] %v1651
        %1668 = vst [vmem:[%s204 + $0x8] sm:$0xf] %v1652
        %1669 = vst [vmem:[%s204 + $0xc] sm:$0xf] %v1653
        %1670 = vst [vmem:[%s204 + $0x10] sm:$0xf] %v1654
        %1671 = vst [vmem:[%s204 + $0x14] sm:$0xf] %v1655
        %1672 = vst [vmem:[%s204 + $0x18] sm:$0xf] %v1656
        %1673 = vst [vmem:[%s204 + $0x1c] sm:$0xf] %v1657
        %s1674 = sand.u32 %s117, 1
        %s1675 = scalar_lea.sflag [#allocation3], %s1674
        %s1676 = sand.u32 %s117, 1
        %s1677 = smul.addr %s1676, 32
        %s1678 = scalar_lea.vmem [#allocation2], %s1677
        // Predicated region
        $region33: #{tpu_custom_call.1} parent=31 // pred_check
          %p1679 = pneg %p127
        $region34: #{tpu_custom_call.1} parent=31 // pred_check_branch
          %1681 = sbr.rel (%p1679) target = $region36
        $region35: #{tpu_custom_call.1} parent=31 // pred_region
          %s1683 = ssub.s32 512, 512
          %1684 = vsyncadd %s1675, %s1683
          %s1685 = smul.addr %s21, 8
          %s1686 = sadd.s32 %s22, %s1685
          %s1687 = smul.addr %s1686, 64
          %s1688 = scalar_lea.hbm %s3, %s1687
          %s1689 = sshll.u32 %s1678, 4
          %s1690 = int_to_ptr.vmem [resolvable:$true] %s1689
          %1695 = dma.vmem_to_hbm [thread:$0]  %s1690, 512, %s1688, %s1675, 64, 64, 4
        $region36: #{tpu_custom_call.1} parent=31 // pred_fallthru
          _
      $region32: #{tpu_custom_call.1} parent=5 // pred_fallthru
        _
      %p1696 = scmp.le.s32.totalorder 2, %s12
      // Predicated region
      $region37: #{tpu_custom_call.1} parent=5 // pred_check
        %p1697 = pneg %p1696
      $region38: #{tpu_custom_call.1} parent=5 // pred_check_branch
        %1699 = sbr.rel (%p1697) target = $region40
      $region39: #{tpu_custom_call.1} parent=5 // pred_region
        %s1700 = ssub.s32 %s12, 2
        // Predicated region
        $region41: #{tpu_custom_call.1} parent=39 // pred_check
          %p1701 = pneg %p133
        $region42: #{tpu_custom_call.1} parent=39 // pred_check_branch
          %1703 = sbr.rel (%p1701) target = $region44
        $region43: #{tpu_custom_call.1} parent=39 // pred_region
          %s1704 = sand.u32 %s118, 1
          %s1705 = scalar_lea.sflag [#allocation3], %s1704
          %s1706 = sand.u32 %s118, 1
          %s1707 = smul.addr %s1706, 32
          %s1708 = scalar_lea.vmem [#allocation2], %s1707
          %1709 = dma.done %s1705, 512
        $region44: #{tpu_custom_call.1} parent=39 // pred_fallthru
          _
      $region40: #{tpu_custom_call.1} parent=5 // pred_fallthru
        _
    $region6: #{tpu_custom_call.1} parent=1 // loop_footer
      %s16 = sadd.s32 1, %s12
    $region7: #{tpu_custom_call.1} parent=1 // loop_footer_branch
      %11 = sbr.rel target = $region3
    $region8: #{tpu_custom_call.1} parent=1 // loop_exit
      _
    %1710 = vsyncpa [#allocation3], 1
    %s1711 = scalar_lea.sflag [#allocation3], 1
    %1712 = vsyncpa %s1711, 1

</llo_original>
